<compile_context>
chip_gen: v7x
topology: tpu7x:2x2x1
jax: 0.10.0
libtpu: 0.0.40
codegen_flags: <defaults>
</compile_context>

<pallas_src>
import functools

import jax
import jax.numpy as jnp
from jax import lax
from jax.experimental import pallas as pl
from jax.experimental.pallas import tpu as pltpu


# dot_general dimension_numbers for "a @ b.T" on 2-D operands
# (contract the last dim of both operands; rhs-transposed MXU feed).
_CONTRACT_LAST = (((1,), (1,)), ((), ()))


def _round_up(n, m):
    return ((n + m - 1) // m) * m


# ----------------------------------------------------------------------------
# Pallas kernel: full MLP forward for one batch tile, all layers fused.
# refs = (x_ref, w0_ref, b0_ref, w1_ref, b1_ref, ..., o_ref)
#   x_ref : (batch_tile, input_size)        -- natural layout, no wrapper xpose
#   wi_ref: (out_i, in_i)                   -- torch nn.Linear layout
#   bi_ref: (out_i, 1) hidden / (1, out) final
#   o_ref : (batch_tile, output_size)       -- natural layout
# ----------------------------------------------------------------------------
def _lnmlp_kernel(n_layers, matmul_dtype, *refs):
    x_ref = refs[0]
    o_ref = refs[-1]
    ws = [refs[1 + 2 * i][...] for i in range(n_layers)]   # pre-cast host-side
    bs = [refs[2 + 2 * i][...] for i in range(n_layers)]   # f32

    x_bt = x_ref[...]                                       # (tile_b, in)

    if n_layers == 1:
        out = lax.dot_general(x_bt.astype(matmul_dtype), ws[0], _CONTRACT_LAST,
                              preferred_element_type=jnp.float32)
        out = out + bs[0]                                   # (1, out) row bcast
    else:
        # First matmul folds the input "transpose" into the MXU feed:
        # (h0, in) x (tile_b, in)^T -> (h0, tile_b). From here on, batch sits
        # on the 128-lane axis, so bias-add and tanh are lane-dense.
        h = lax.dot_general(ws[0], x_bt.astype(matmul_dtype), _CONTRACT_LAST,
                            preferred_element_type=jnp.float32)
        h = jnp.tanh(h + bs[0])                             # f32 tanh -> EUP

        for i in range(1, n_layers - 1):
            h = jnp.dot(ws[i], h.astype(matmul_dtype),
                        preferred_element_type=jnp.float32)
            h = jnp.tanh(h + bs[i])

        # Single XLU transpose back to batch-major so the output store is in
        # the natural (batch, out) layout (no wrapper transpose round trip).
        h_bt = jnp.transpose(h)                             # (tile_b, h_last)
        out = lax.dot_general(h_bt.astype(matmul_dtype), ws[-1], _CONTRACT_LAST,
                              preferred_element_type=jnp.float32)
        out = out + bs[-1]                                  # (1, out) row bcast

    o_ref[...] = out.astype(o_ref.dtype)


def lnmlp_forward(x, weights, biases, *, batch_tile=None,
                  matmul_dtype=jnp.float32, single_buffer_params=True):
    """Fused LNMLP forward pass with a Pallas TPU kernel.

    x:       (B, input_size) float32
    weights: list of (out_i, in_i) float32 arrays (torch nn.Linear layout)
    biases:  list of (out_i,)      float32 arrays
    returns: (B, output_size)
    """
    n_layers = len(weights)
    B, in_size = x.shape
    out_size = weights[-1].shape[0]

    if batch_tile is None:
        # Whole (padded) batch in one grid step up to 512 columns: this MLP is
        # overhead-bound, so fewer grid steps beat everything else. Per-tile
        # VMEM even at 512 is <100 KiB -- fine on v5e/v6e (128 MiB) and v7x
        # (64 MiB physical / 32 MiB default scoped).
        batch_tile = min(512, _round_up(B, 8))
    n_tiles = pl.cdiv(B, batch_tile)
    B_pad = n_tiles * batch_tile
    if B_pad != B:
        # Only when B is not a multiple of the tile (not hit in the demo).
        x = jnp.pad(x, ((0, B_pad - B), (0, 0)))

    # Pre-shape / pre-cast parameters host-side ONCE (no per-step kernel casts;
    # when matmul_dtype is f32 the astype is a no-op).
    w_args, b_args = [], []
    for i, (w, b) in enumerate(zip(weights, biases)):
        w_args.append(w.astype(matmul_dtype))
        if i == n_layers - 1:
            b_args.append(b.reshape(1, -1).astype(jnp.float32))  # row, batch-major add
        else:
            b_args.append(b.reshape(-1, 1).astype(jnp.float32))  # col, lane broadcast

    flops = 2 * B_pad * sum(int(w.shape[0]) * int(w.shape[1]) for w in weights)
    transcendentals = B_pad * sum(int(w.shape[0]) for w in weights[:-1])
    bytes_accessed = int(
        x.size * x.dtype.itemsize
        + sum(w.size * w.dtype.itemsize for w in w_args)
        + sum(b.size * b.dtype.itemsize for b in b_args)
        + B_pad * out_size * x.dtype.itemsize)

    kernel = functools.partial(_lnmlp_kernel, n_layers, matmul_dtype)

    def _param_spec(shape, single_buffer):
        # Constant index_map -> double buffering buys nothing; single-buffer
        # halves parameter-resident VMEM (hygiene that matters at scale).
        if single_buffer:
            return pl.BlockSpec(shape, lambda i: (0, 0),
                                pipeline_mode=pl.Buffered(1))
        return pl.BlockSpec(shape, lambda i: (0, 0))

    def _run(single_buffer):
        in_specs = [pl.BlockSpec((batch_tile, in_size), lambda i: (i, 0))]
        args = [x]
        for w, b in zip(w_args, b_args):
            in_specs.append(_param_spec(w.shape, single_buffer))
            in_specs.append(_param_spec(b.shape, single_buffer))
            args.append(w)
            args.append(b)
        out_spec = pl.BlockSpec((batch_tile, out_size), lambda i: (i, 0))

        return pl.pallas_call(
            kernel,
            out_shape=jax.ShapeDtypeStruct((B_pad, out_size), x.dtype),
            grid=(n_tiles,),
            in_specs=in_specs,
            out_specs=out_spec,
            compiler_params=pltpu.CompilerParams(
                dimension_semantics=("parallel",)),
            cost_estimate=pl.CostEstimate(
                flops=flops,
                transcendentals=transcendentals,
                bytes_accessed=bytes_accessed),
        )(*args)

    if single_buffer_params:
        try:
            out = _run(True)
        except Exception:
            # Some Pallas builds reject pipeline_mode on pallas_call BlockSpecs;
            # fall back to default double-buffered params (still correct).
            out = _run(False)
    else:
        out = _run(False)

    return out[:B] if B_pad != B else out


# ----------------------------------------------------------------------------
# Deterministic parameter init matching weights_init_mlp / init_normc_
# (weights kept in torch nn.Linear layout: (out_features, in_features)).
# ----------------------------------------------------------------------------
def init_lnmlp_params(key, input_size, hidden_sizes, output_size, gain=1.0):
    topology = [input_size] + list(hidden_sizes) + [output_size]
    weights, biases = [], []
    for i in range(len(topology) - 1):
        fan_in, fan_out = topology[i], topology[i + 1]
        key, sub = jax.random.split(key)
        w = jax.random.normal(sub, (fan_out, fan_in), dtype=jnp.float32)
        w = w * (gain / jnp.sqrt(jnp.sum(w ** 2, axis=1, keepdims=True)))
        weights.append(w)                               # (out, in)
        biases.append(jnp.zeros((fan_out,), dtype=jnp.float32))
    return weights, biases


def lnmlp_reference(x, weights, biases):
    h = x
    n = len(weights)
    for i, (w, b) in enumerate(zip(weights, biases)):
        h = h @ w.T + b
        if i < n - 1:
            h = jnp.tanh(h)
    return h


if __name__ == "__main__":
    # Shapes consistent with the module: MLP 16 -> [32, 32] -> 4, batched.
    # batch=256 with the default tile choice gives batch_tile=256, grid=(1,),
    # no padding, and zero wrapper-side layout ops.
    input_size = 16
    hidden_sizes = [32, 32]
    output_size = 4
    batch = 256

    key = jax.random.PRNGKey(0)
    key_x, key_p = jax.random.split(key)

    x = jax.random.normal(key_x, (batch, input_size), dtype=jnp.float32)
    weights, biases = init_lnmlp_params(
        key_p, input_size, hidden_sizes, output_size, gain=1.0)

    out = lnmlp_forward(x, weights, biases)
    out = jax.block_until_ready(out)

    ref = lnmlp_reference(x, weights, biases)
    assert out.shape == (batch, output_size)
    assert jnp.allclose(out, ref, atol=1e-4, rtol=1e-4), "mismatch vs reference"

    print("KERNEL_OK")
</pallas_src>

<mosaic_0001>
module attributes {stable_mosaic.version = 11 : i64} {
  func.func @_lnmlp_kernel(%arg0: i32, %arg1: memref<256x16xf32, #tpu.memory_space<vmem>>, %arg2: memref<32x16xf32, #tpu.memory_space<vmem>>, %arg3: memref<32x1xf32, #tpu.memory_space<vmem>>, %arg4: memref<32x32xf32, #tpu.memory_space<vmem>>, %arg5: memref<32x1xf32, #tpu.memory_space<vmem>>, %arg6: memref<4x32xf32, #tpu.memory_space<vmem>>, %arg7: memref<1x4xf32, #tpu.memory_space<vmem>>, %arg8: memref<256x4xf32, #tpu.memory_space<vmem>>) attributes {dimension_semantics = [#tpu.dimension_semantics<parallel>], iteration_bounds = array<i64: 1>, scalar_prefetch = 0 : i64, scratch_operands = 0 : i64, tpu.core_type = #tpu.core_type<tc>, window_params = [{transform_indices = @transform_0, window_bounds = array<i64: 256, 16>}, {pipeline_mode = #tpu.pipeline_mode<synchronous>, transform_indices = @transform_1, window_bounds = array<i64: 32, 16>}, {pipeline_mode = #tpu.pipeline_mode<synchronous>, transform_indices = @transform_2, window_bounds = array<i64: 32, 1>}, {pipeline_mode = #tpu.pipeline_mode<synchronous>, transform_indices = @transform_3, window_bounds = array<i64: 32, 32>}, {pipeline_mode = #tpu.pipeline_mode<synchronous>, transform_indices = @transform_4, window_bounds = array<i64: 32, 1>}, {pipeline_mode = #tpu.pipeline_mode<synchronous>, transform_indices = @transform_5, window_bounds = array<i64: 4, 32>}, {pipeline_mode = #tpu.pipeline_mode<synchronous>, transform_indices = @transform_6, window_bounds = array<i64: 1, 4>}, {transform_indices = @transform_7, window_bounds = array<i64: 256, 4>}]} {
    %c0 = arith.constant 0 : index
    %c0_0 = arith.constant 0 : index
    %0 = vector.load %arg2[%c0, %c0_0] : memref<32x16xf32, #tpu.memory_space<vmem>>, vector<32x16xf32>
    %c0_1 = arith.constant 0 : index
    %c0_2 = arith.constant 0 : index
    %1 = vector.load %arg4[%c0_1, %c0_2] : memref<32x32xf32, #tpu.memory_space<vmem>>, vector<32x32xf32>
    %c0_3 = arith.constant 0 : index
    %c0_4 = arith.constant 0 : index
    %2 = vector.load %arg6[%c0_3, %c0_4] : memref<4x32xf32, #tpu.memory_space<vmem>>, vector<4x32xf32>
    %c0_5 = arith.constant 0 : index
    %c0_6 = arith.constant 0 : index
    %3 = vector.load %arg3[%c0_5, %c0_6] : memref<32x1xf32, #tpu.memory_space<vmem>>, vector<32x1xf32>
    %c0_7 = arith.constant 0 : index
    %c0_8 = arith.constant 0 : index
    %4 = vector.load %arg5[%c0_7, %c0_8] : memref<32x1xf32, #tpu.memory_space<vmem>>, vector<32x1xf32>
    %c0_9 = arith.constant 0 : index
    %c0_10 = arith.constant 0 : index
    %5 = vector.load %arg7[%c0_9, %c0_10] : memref<1x4xf32, #tpu.memory_space<vmem>>, vector<1x4xf32>
    %c0_11 = arith.constant 0 : index
    %c0_12 = arith.constant 0 : index
    %6 = vector.load %arg1[%c0_11, %c0_12] : memref<256x16xf32, #tpu.memory_space<vmem>>, vector<256x16xf32>
    %cst = arith.constant dense<0.000000e+00> : vector<32x256xf32>
    %7 = tpu.matmul %0, %6, %cst {dimension_numbers = #tpu.dot_dimension_numbers<[1], [1], [0], [0], [0, 0, 1, 0], [], []>} : vector<32x16xf32>, vector<256x16xf32>, vector<32x256xf32> -> vector<32x256xf32>
    %8 = vector.broadcast %3 : vector<32x1xf32> to vector<32x256xf32>
    %9 = arith.addf %7, %8 : vector<32x256xf32>
    %10 = math.tanh %9 : vector<32x256xf32>
    %cst_13 = arith.constant dense<0.000000e+00> : vector<32x256xf32>
    %11 = tpu.matmul %1, %10, %cst_13 {dimension_numbers = #tpu.dot_dimension_numbers<[1], [0], [0], [1], [0, 0, 1, 1], [], []>} : vector<32x32xf32>, vector<32x256xf32>, vector<32x256xf32> -> vector<32x256xf32>
    %12 = vector.broadcast %4 : vector<32x1xf32> to vector<32x256xf32>
    %13 = arith.addf %11, %12 : vector<32x256xf32>
    %14 = math.tanh %13 : vector<32x256xf32>
    %15 = tpu.transpose %14, [1, 0] : vector<32x256xf32> -> vector<256x32xf32>
    %cst_14 = arith.constant dense<0.000000e+00> : vector<256x4xf32>
    %16 = tpu.matmul %15, %2, %cst_14 {dimension_numbers = #tpu.dot_dimension_numbers<[1], [1], [0], [0], [0, 0, 1, 0], [], []>} : vector<256x32xf32>, vector<4x32xf32>, vector<256x4xf32> -> vector<256x4xf32>
    %17 = vector.broadcast %5 : vector<1x4xf32> to vector<256x4xf32>
    %18 = arith.addf %16, %17 : vector<256x4xf32>
    %c0_15 = arith.constant 0 : index
    %c0_16 = arith.constant 0 : index
    %19 = vector.load %arg8[%c0_15, %c0_16] : memref<256x4xf32, #tpu.memory_space<vmem>>, vector<256x4xf32>
    tpu.vector_store %arg8[%c0_15, %c0_16], %18 {strides = array<i32>} : memref<256x4xf32, #tpu.memory_space<vmem>>, vector<256x4xf32>,
    return
  }
  func.func @transform_0(%arg0: i32) -> (i32, i32) {
    %c0_i32 = arith.constant 0 : i32
    %c0_i32_0 = arith.constant 0 : i32
    return %arg0, %c0_i32 : i32, i32
  }
  func.func @transform_1(%arg0: i32) -> (i32, i32) {
    %c0_i32 = arith.constant 0 : i32
    %c0_i32_0 = arith.constant 0 : i32
    %c0_i32_1 = arith.constant 0 : i32
    return %c0_i32, %c0_i32_0 : i32, i32
  }
  func.func @transform_2(%arg0: i32) -> (i32, i32) {
    %c0_i32 = arith.constant 0 : i32
    %c0_i32_0 = arith.constant 0 : i32
    %c0_i32_1 = arith.constant 0 : i32
    return %c0_i32, %c0_i32_0 : i32, i32
  }
  func.func @transform_3(%arg0: i32) -> (i32, i32) {
    %c0_i32 = arith.constant 0 : i32
    %c0_i32_0 = arith.constant 0 : i32
    %c0_i32_1 = arith.constant 0 : i32
    return %c0_i32, %c0_i32_0 : i32, i32
  }
  func.func @transform_4(%arg0: i32) -> (i32, i32) {
    %c0_i32 = arith.constant 0 : i32
    %c0_i32_0 = arith.constant 0 : i32
    %c0_i32_1 = arith.constant 0 : i32
    return %c0_i32, %c0_i32_0 : i32, i32
  }
  func.func @transform_5(%arg0: i32) -> (i32, i32) {
    %c0_i32 = arith.constant 0 : i32
    %c0_i32_0 = arith.constant 0 : i32
    %c0_i32_1 = arith.constant 0 : i32
    return %c0_i32, %c0_i32_0 : i32, i32
  }
  func.func @transform_6(%arg0: i32) -> (i32, i32) {
    %c0_i32 = arith.constant 0 : i32
    %c0_i32_0 = arith.constant 0 : i32
    %c0_i32_1 = arith.constant 0 : i32
    return %c0_i32, %c0_i32_0 : i32, i32
  }
  func.func @transform_7(%arg0: i32) -> (i32, i32) {
    %c0_i32 = arith.constant 0 : i32
    %c0_i32_0 = arith.constant 0 : i32
    return %arg0, %c0_i32 : i32, i32
  }
}

module attributes {stable_mosaic.version = 11 : i64} {
  func.func @_lnmlp_kernel(%arg0: i32, %arg1: memref<256x16xf32, #tpu.memory_space<vmem>>, %arg2: memref<32x16xf32, #tpu.memory_space<vmem>>, %arg3: memref<32x1xf32, #tpu.memory_space<vmem>>, %arg4: memref<32x32xf32, #tpu.memory_space<vmem>>, %arg5: memref<32x1xf32, #tpu.memory_space<vmem>>, %arg6: memref<4x32xf32, #tpu.memory_space<vmem>>, %arg7: memref<1x4xf32, #tpu.memory_space<vmem>>, %arg8: memref<256x4xf32, #tpu.memory_space<vmem>>) attributes {dimension_semantics = [#tpu.dimension_semantics<parallel>], iteration_bounds = array<i64: 1>, scalar_prefetch = 0 : i64, scratch_operands = 0 : i64, tpu.core_type = #tpu.core_type<tc>, window_params = [{transform_indices = @transform_0, window_bounds = array<i64: 256, 16>}, {pipeline_mode = #tpu.pipeline_mode<synchronous>, transform_indices = @transform_1, window_bounds = array<i64: 32, 16>}, {pipeline_mode = #tpu.pipeline_mode<synchronous>, transform_indices = @transform_2, window_bounds = array<i64: 32, 1>}, {pipeline_mode = #tpu.pipeline_mode<synchronous>, transform_indices = @transform_3, window_bounds = array<i64: 32, 32>}, {pipeline_mode = #tpu.pipeline_mode<synchronous>, transform_indices = @transform_4, window_bounds = array<i64: 32, 1>}, {pipeline_mode = #tpu.pipeline_mode<synchronous>, transform_indices = @transform_5, window_bounds = array<i64: 4, 32>}, {pipeline_mode = #tpu.pipeline_mode<synchronous>, transform_indices = @transform_6, window_bounds = array<i64: 1, 4>}, {transform_indices = @transform_7, window_bounds = array<i64: 256, 4>}]} {
    %c0 = arith.constant 0 : index
    %c0_0 = arith.constant 0 : index
    %0 = vector.load %arg2[%c0, %c0_0] : memref<32x16xf32, #tpu.memory_space<vmem>>, vector<32x16xf32>
    %c0_1 = arith.constant 0 : index
    %c0_2 = arith.constant 0 : index
    %1 = vector.load %arg4[%c0_1, %c0_2] : memref<32x32xf32, #tpu.memory_space<vmem>>, vector<32x32xf32>
    %c0_3 = arith.constant 0 : index
    %c0_4 = arith.constant 0 : index
    %2 = vector.load %arg6[%c0_3, %c0_4] : memref<4x32xf32, #tpu.memory_space<vmem>>, vector<4x32xf32>
    %c0_5 = arith.constant 0 : index
    %c0_6 = arith.constant 0 : index
    %3 = vector.load %arg3[%c0_5, %c0_6] : memref<32x1xf32, #tpu.memory_space<vmem>>, vector<32x1xf32>
    %c0_7 = arith.constant 0 : index
    %c0_8 = arith.constant 0 : index
    %4 = vector.load %arg5[%c0_7, %c0_8] : memref<32x1xf32, #tpu.memory_space<vmem>>, vector<32x1xf32>
    %c0_9 = arith.constant 0 : index
    %c0_10 = arith.constant 0 : index
    %5 = vector.load %arg7[%c0_9, %c0_10] : memref<1x4xf32, #tpu.memory_space<vmem>>, vector<1x4xf32>
    %c0_11 = arith.constant 0 : index
    %c0_12 = arith.constant 0 : index
    %6 = vector.load %arg1[%c0_11, %c0_12] : memref<256x16xf32, #tpu.memory_space<vmem>>, vector<256x16xf32>
    %cst = arith.constant dense<0.000000e+00> : vector<32x256xf32>
    %7 = tpu.matmul %0, %6, %cst {dimension_numbers = #tpu.dot_dimension_numbers<[1], [1], [0], [0], [0, 0, 1, 0], [], []>} : vector<32x16xf32>, vector<256x16xf32>, vector<32x256xf32> -> vector<32x256xf32>
    %8 = vector.broadcast %3 : vector<32x1xf32> to vector<32x256xf32>
    %9 = arith.addf %7, %8 : vector<32x256xf32>
    %10 = math.tanh %9 : vector<32x256xf32>
    %cst_13 = arith.constant dense<0.000000e+00> : vector<32x256xf32>
    %11 = tpu.matmul %1, %10, %cst_13 {dimension_numbers = #tpu.dot_dimension_numbers<[1], [0], [0], [1], [0, 0, 1, 1], [], []>} : vector<32x32xf32>, vector<32x256xf32>, vector<32x256xf32> -> vector<32x256xf32>
    %12 = vector.broadcast %4 : vector<32x1xf32> to vector<32x256xf32>
    %13 = arith.addf %11, %12 : vector<32x256xf32>
    %14 = math.tanh %13 : vector<32x256xf32>
    %15 = tpu.transpose %14, [1, 0] : vector<32x256xf32> -> vector<256x32xf32>
    %cst_14 = arith.constant dense<0.000000e+00> : vector<256x4xf32>
    %16 = tpu.matmul %15, %2, %cst_14 {dimension_numbers = #tpu.dot_dimension_numbers<[1], [1], [0], [0], [0, 0, 1, 0], [], []>} : vector<256x32xf32>, vector<4x32xf32>, vector<256x4xf32> -> vector<256x4xf32>
    %17 = vector.broadcast %5 : vector<1x4xf32> to vector<256x4xf32>
    %18 = arith.addf %16, %17 : vector<256x4xf32>
    %c0_15 = arith.constant 0 : index
    %c0_16 = arith.constant 0 : index
    %19 = vector.load %arg8[%c0_15, %c0_16] : memref<256x4xf32, #tpu.memory_space<vmem>>, vector<256x4xf32>
    tpu.vector_store %arg8[%c0_15, %c0_16], %18 {strides = array<i32>} : memref<256x4xf32, #tpu.memory_space<vmem>>, vector<256x4xf32>,
    return
  }
  func.func @transform_0(%arg0: i32) -> (i32, i32) {
    %c0_i32 = arith.constant 0 : i32
    %c0_i32_0 = arith.constant 0 : i32
    return %arg0, %c0_i32 : i32, i32
  }
  func.func @transform_1(%arg0: i32) -> (i32, i32) {
    %c0_i32 = arith.constant 0 : i32
    %c0_i32_0 = arith.constant 0 : i32
    %c0_i32_1 = arith.constant 0 : i32
    return %c0_i32, %c0_i32_0 : i32, i32
  }
  func.func @transform_2(%arg0: i32) -> (i32, i32) {
    %c0_i32 = arith.constant 0 : i32
    %c0_i32_0 = arith.constant 0 : i32
    %c0_i32_1 = arith.constant 0 : i32
    return %c0_i32, %c0_i32_0 : i32, i32
  }
  func.func @transform_3(%arg0: i32) -> (i32, i32) {
    %c0_i32 = arith.constant 0 : i32
    %c0_i32_0 = arith.constant 0 : i32
    %c0_i32_1 = arith.constant 0 : i32
    return %c0_i32, %c0_i32_0 : i32, i32
  }
  func.func @transform_4(%arg0: i32) -> (i32, i32) {
    %c0_i32 = arith.constant 0 : i32
    %c0_i32_0 = arith.constant 0 : i32
    %c0_i32_1 = arith.constant 0 : i32
    return %c0_i32, %c0_i32_0 : i32, i32
  }
  func.func @transform_5(%arg0: i32) -> (i32, i32) {
    %c0_i32 = arith.constant 0 : i32
    %c0_i32_0 = arith.constant 0 : i32
    %c0_i32_1 = arith.constant 0 : i32
    return %c0_i32, %c0_i32_0 : i32, i32
  }
  func.func @transform_6(%arg0: i32) -> (i32, i32) {
    %c0_i32 = arith.constant 0 : i32
    %c0_i32_0 = arith.constant 0 : i32
    %c0_i32_1 = arith.constant 0 : i32
    return %c0_i32, %c0_i32_0 : i32, i32
  }
  func.func @transform_7(%arg0: i32) -> (i32, i32) {
    %c0_i32 = arith.constant 0 : i32
    %c0_i32_0 = arith.constant 0 : i32
    return %arg0, %c0_i32 : i32, i32
  }
}

</mosaic_0001>

<llo_original>
// kernel: tpu_custom_call.1
$region0: #{tpu_custom_call.1}
  #allocation0 [shape = 'u32[]', space=smem, size = 0x4, offset = 0x4, fixed_abs, tag = 'smem constant byte address 0x4 - core index']
  #allocation1 [shape = 'u32[144,128]{1,0:T(1,128)}', space=vmem, size = 0x12000, scoped, tag = 'internal scratch']
  %s0 = inlined_call_operand.vmem [shape: f32[256,16], index: 0, kind: input, shape index: {}]
  %s1 = inlined_call_operand.vmem [shape: f32[32,16], index: 1, kind: input, shape index: {}]
  %s2 = inlined_call_operand.vmem [shape: f32[32,1], index: 2, kind: input, shape index: {}]
  %s3 = inlined_call_operand.vmem [shape: f32[32,32], index: 3, kind: input, shape index: {}]
  %s4 = inlined_call_operand.vmem [shape: f32[32,1], index: 4, kind: input, shape index: {}]
  %s5 = inlined_call_operand.vmem [shape: f32[4,32], index: 5, kind: input, shape index: {}]
  %s6 = inlined_call_operand.vmem [shape: f32[1,4], index: 6, kind: input, shape index: {}]
  %s7 = inlined_call_operand.vmem [shape: f32[256,4], index: 7, kind: output, shape index: {}]
  %s8 = sld [smem:[#allocation0]]
  $region38: #{tpu_custom_call.1} parent=0
    _
  %s10 = ssub.s32 1, %s8
  %s11 = scalar_select 0, %s10, %s8
  // Predicated region
  $region2: #{tpu_custom_call.1} parent=0 // pred_check
    _
  $region3: #{tpu_custom_call.1} parent=0 // pred_check_branch
    %13 = sbr.rel (0) target = $region5
  $region4: #{tpu_custom_call.1} parent=0 // pred_region
    _
  $region5: #{tpu_custom_call.1} parent=0 // pred_fallthru
    _
  // Predicated region
  $region6: #{tpu_custom_call.1} parent=0 // pred_check
    _
  $region7: #{tpu_custom_call.1} parent=0 // pred_check_branch
    %15 = sbr.rel (0) target = $region9
  $region8: #{tpu_custom_call.1} parent=0 // pred_region
    _
  $region9: #{tpu_custom_call.1} parent=0 // pred_fallthru
    _
  // Predicated region
  $region10: #{tpu_custom_call.1} parent=0 // pred_check
    _
  $region11: #{tpu_custom_call.1} parent=0 // pred_check_branch
    %17 = sbr.rel (0) target = $region13
  $region12: #{tpu_custom_call.1} parent=0 // pred_region
    _
  $region13: #{tpu_custom_call.1} parent=0 // pred_fallthru
    _
  // Predicated region
  $region14: #{tpu_custom_call.1} parent=0 // pred_check
    _
  $region15: #{tpu_custom_call.1} parent=0 // pred_check_branch
    %19 = sbr.rel (0) target = $region17
  $region16: #{tpu_custom_call.1} parent=0 // pred_region
    _
  $region17: #{tpu_custom_call.1} parent=0 // pred_fallthru
    _
  // Predicated region
  $region18: #{tpu_custom_call.1} parent=0 // pred_check
    _
  $region19: #{tpu_custom_call.1} parent=0 // pred_check_branch
    %21 = sbr.rel (0) target = $region21
  $region20: #{tpu_custom_call.1} parent=0 // pred_region
    _
  $region21: #{tpu_custom_call.1} parent=0 // pred_fallthru
    _
  // Predicated region
  $region22: #{tpu_custom_call.1} parent=0 // pred_check
    _
  $region23: #{tpu_custom_call.1} parent=0 // pred_check_branch
    %23 = sbr.rel (0) target = $region25
  $region24: #{tpu_custom_call.1} parent=0 // pred_region
    _
  $region25: #{tpu_custom_call.1} parent=0 // pred_fallthru
    _
  // Predicated region
  $region26: #{tpu_custom_call.1} parent=0 // pred_check
    _
  $region27: #{tpu_custom_call.1} parent=0 // pred_check_branch
    %25 = sbr.rel (0) target = $region29
  $region28: #{tpu_custom_call.1} parent=0 // pred_region
    _
  $region29: #{tpu_custom_call.1} parent=0 // pred_fallthru
    _
  %v26 = vld [vmem:[%s1] sm:$0xff]
  %v27 = vld [vmem:[%s1 + $0x8] sm:$0xff]
  %v28 = vld [vmem:[%s1 + $0x10] sm:$0xff]
  %v29 = vld [vmem:[%s1 + $0x18] sm:$0xff]
  %v30 = vld [vmem:[%s3] sm:$0xff]
  %v31 = vld [vmem:[%s3 + $0x8] sm:$0xff]
  %v32 = vld [vmem:[%s3 + $0x10] sm:$0xff]
  %v33 = vld [vmem:[%s3 + $0x18] sm:$0xff]
  %v34 = vld [vmem:[%s5] sm:$0xf]
  %v35 = vld [vmem:[%s2] sm:$0xff]
  %v36 = vld [vmem:[%s2 + $0x8] sm:$0xff]
  %v37 = vld [vmem:[%s2 + $0x10] sm:$0xff]
  %v38 = vld [vmem:[%s2 + $0x18] sm:$0xff]
  %v39 = vld [vmem:[%s4] sm:$0xff]
  %v40 = vld [vmem:[%s4 + $0x8] sm:$0xff]
  %v41 = vld [vmem:[%s4 + $0x10] sm:$0xff]
  %v42 = vld [vmem:[%s4 + $0x18] sm:$0xff]
  %v43 = vld [vmem:[%s6] sm:$0x1]
  %v44 = vld [vmem:[%s0] sm:$0xff]
  %v45 = vld [vmem:[%s0 + $0x8] sm:$0xff]
  %v46 = vld [vmem:[%s0 + $0x10] sm:$0xff]
  %v47 = vld [vmem:[%s0 + $0x18] sm:$0xff]
  %v48 = vld [vmem:[%s0 + $0x20] sm:$0xff]
  %v49 = vld [vmem:[%s0 + $0x28] sm:$0xff]
  %v50 = vld [vmem:[%s0 + $0x30] sm:$0xff]
  %v51 = vld [vmem:[%s0 + $0x38] sm:$0xff]
  %v52 = vld [vmem:[%s0 + $0x40] sm:$0xff]
  %v53 = vld [vmem:[%s0 + $0x48] sm:$0xff]
  %v54 = vld [vmem:[%s0 + $0x50] sm:$0xff]
  %v55 = vld [vmem:[%s0 + $0x58] sm:$0xff]
  %v56 = vld [vmem:[%s0 + $0x60] sm:$0xff]
  %v57 = vld [vmem:[%s0 + $0x68] sm:$0xff]
  %v58 = vld [vmem:[%s0 + $0x70] sm:$0xff]
  %v59 = vld [vmem:[%s0 + $0x78] sm:$0xff]
  %v60 = vld [vmem:[%s0 + $0x80] sm:$0xff]
  %v61 = vld [vmem:[%s0 + $0x88] sm:$0xff]
  %v62 = vld [vmem:[%s0 + $0x90] sm:$0xff]
  %v63 = vld [vmem:[%s0 + $0x98] sm:$0xff]
  %v64 = vld [vmem:[%s0 + $0xa0] sm:$0xff]
  %v65 = vld [vmem:[%s0 + $0xa8] sm:$0xff]
  %v66 = vld [vmem:[%s0 + $0xb0] sm:$0xff]
  %v67 = vld [vmem:[%s0 + $0xb8] sm:$0xff]
  %v68 = vld [vmem:[%s0 + $0xc0] sm:$0xff]
  %v69 = vld [vmem:[%s0 + $0xc8] sm:$0xff]
  %v70 = vld [vmem:[%s0 + $0xd0] sm:$0xff]
  %v71 = vld [vmem:[%s0 + $0xd8] sm:$0xff]
  %v72 = vld [vmem:[%s0 + $0xe0] sm:$0xff]
  %v73 = vld [vmem:[%s0 + $0xe8] sm:$0xff]
  %v74 = vld [vmem:[%s0 + $0xf0] sm:$0xff]
  %v75 = vld [vmem:[%s0 + $0xf8] sm:$0xff]
  %77 = vset.pattern.permute.xlu0 0
  %78 = vperm.xlu0 %77, %v35
  %v79 = vpop.permute.xlu0 %78
  %82 = vset.pattern.permute.xlu0 0
  %83 = vperm.xlu0 %82, %v36
  %v84 = vpop.permute.xlu0 %83
  %87 = vset.pattern.permute.xlu0 0
  %88 = vperm.xlu0 %87, %v37
  %v89 = vpop.permute.xlu0 %88
  %92 = vset.pattern.permute.xlu0 0
  %93 = vperm.xlu0 %92, %v38
  %v94 = vpop.permute.xlu0 %93
  %vm96 = vcmask 130048
  %v98 = vsel %vm96, %v26, 0
  %v101 = vsel %vm96, %v27, 0
  %v104 = vsel %vm96, %v28, 0
  %v107 = vsel %vm96, %v29, 0
  %v110 = vsel %vm96, %v44, 0
  %v113 = vsel %vm96, %v45, 0
  %v116 = vsel %vm96, %v46, 0
  %v119 = vsel %vm96, %v47, 0
  %v122 = vsel %vm96, %v48, 0
  %v125 = vsel %vm96, %v49, 0
  %v128 = vsel %vm96, %v50, 0
  %v131 = vsel %vm96, %v51, 0
  %v134 = vsel %vm96, %v52, 0
  %v137 = vsel %vm96, %v53, 0
  %v140 = vsel %vm96, %v54, 0
  %v143 = vsel %vm96, %v55, 0
  %v146 = vsel %vm96, %v56, 0
  %v149 = vsel %vm96, %v57, 0
  %v152 = vsel %vm96, %v58, 0
  %v155 = vsel %vm96, %v59, 0
  %v158 = vsel %vm96, %v60, 0
  %v161 = vsel %vm96, %v61, 0
  %v164 = vsel %vm96, %v62, 0
  %v167 = vsel %vm96, %v63, 0
  %v170 = vsel %vm96, %v64, 0
  %v173 = vsel %vm96, %v65, 0
  %v176 = vsel %vm96, %v66, 0
  %v179 = vsel %vm96, %v67, 0
  %v182 = vsel %vm96, %v68, 0
  %v185 = vsel %vm96, %v69, 0
  %v188 = vsel %vm96, %v70, 0
  %v191 = vsel %vm96, %v71, 0
  %v194 = vsel %vm96, %v72, 0
  %v197 = vsel %vm96, %v73, 0
  %v200 = vsel %vm96, %v74, 0
  %v203 = vsel %vm96, %v75, 0
  %205 = vmatprep.subr.mxu0 0.0
  %206 = vmatpush1.xpose.msra.mxu0 %v110
  %207 = vmatprep.subr.mxu0 0.0
  %208 = vmatpush1.xpose.msra.mxu0 %v113
  %209 = vmatprep.subr.mxu0 0.0
  %210 = vmatpush1.xpose.msra.mxu0 %v116
  %211 = vmatprep.subr.mxu0 0.0
  %212 = vmatpush1.xpose.msra.mxu0 %v119
  %213 = vmatprep.subr.mxu0 0.0
  %214 = vmatpush1.xpose.msra.mxu0 %v122
  %215 = vmatprep.subr.mxu0 0.0
  %216 = vmatpush1.xpose.msra.mxu0 %v125
  %217 = vmatprep.subr.mxu0 0.0
  %218 = vmatpush1.xpose.msra.mxu0 %v128
  %219 = vmatprep.subr.mxu0 0.0
  %220 = vmatpush1.xpose.msra.mxu0 %v131
  %221 = vmatprep.subr.mxu0 0.0
  %222 = vmatpush1.xpose.msra.mxu0 %v134
  %223 = vmatprep.subr.mxu0 0.0
  %224 = vmatpush1.xpose.msra.mxu0 %v137
  %225 = vmatprep.subr.mxu0 0.0
  %226 = vmatpush1.xpose.msra.mxu0 %v140
  %227 = vmatprep.subr.mxu0 0.0
  %228 = vmatpush1.xpose.msra.mxu0 %v143
  %229 = vmatprep.subr.mxu0 0.0
  %230 = vmatpush1.xpose.msra.mxu0 %v146
  %231 = vmatprep.subr.mxu0 0.0
  %232 = vmatpush1.xpose.msra.mxu0 %v149
  %233 = vmatprep.subr.mxu0 0.0
  %234 = vmatpush1.xpose.msra.mxu0 %v152
  %235 = vmatprep.subr.mxu0 0.0
  %236 = vmatpush1.xpose.msra.mxu0 %v155
  %237 = vmatprep.subr.mxu0 0.0
  %238 = vmatpush1.xpose.msra.mxu0 %v158
  %239 = vmatprep.subr.mxu0 0.0
  %240 = vmatpush1.xpose.msra.mxu0 %v161
  %241 = vmatprep.subr.mxu0 0.0
  %242 = vmatpush1.xpose.msra.mxu0 %v164
  %243 = vmatprep.subr.mxu0 0.0
  %244 = vmatpush1.xpose.msra.mxu0 %v167
  %245 = vmatprep.subr.mxu0 0.0
  %246 = vmatpush1.xpose.msra.mxu0 %v170
  %247 = vmatprep.subr.mxu0 0.0
  %248 = vmatpush1.xpose.msra.mxu0 %v173
  %249 = vmatprep.subr.mxu0 0.0
  %250 = vmatpush1.xpose.msra.mxu0 %v176
  %251 = vmatprep.subr.mxu0 0.0
  %252 = vmatpush1.xpose.msra.mxu0 %v179
  %253 = vmatprep.subr.mxu0 0.0
  %254 = vmatpush1.xpose.msra.mxu0 %v182
  %255 = vmatprep.subr.mxu0 0.0
  %256 = vmatpush1.xpose.msra.mxu0 %v185
  %257 = vmatprep.subr.mxu0 0.0
  %258 = vmatpush1.xpose.msra.mxu0 %v188
  %259 = vmatprep.subr.mxu0 0.0
  %260 = vmatpush1.xpose.msra.mxu0 %v191
  %261 = vmatprep.subr.mxu0 0.0
  %262 = vmatpush1.xpose.msra.mxu0 %v194
  %263 = vmatprep.subr.mxu0 0.0
  %264 = vmatpush1.xpose.msra.mxu0 %v197
  %265 = vmatprep.subr.mxu0 0.0
  %266 = vmatpush1.xpose.msra.mxu0 %v200
  %267 = vmatprep.subr.mxu0 0.0
  %268 = vmatpush1.xpose.msra.mxu0 %v203
  %269 = vmatprep.mubr.f32.mxu0 0.0
  %270 = vmatmul.mubr.f32.gmra.mrb[0].mxu0 %v98
  %v271 = vpop.f32.mrb[0].mxu0
  %v272 = vadd.f32 %v79, %v271
  %v273 = vpop.f32.mrb[0].mxu0
  %v274 = vadd.f32 %v79, %v273
  %275 = vmatprep.mubr.f32.mxu0 0.0
  %276 = vmatmul.mubr.f32.gmra.mrb[0].mxu0 %v101
  %v277 = vpop.f32.mrb[0].mxu0
  %v278 = vadd.f32 %v84, %v277
  %v279 = vpop.f32.mrb[0].mxu0
  %v280 = vadd.f32 %v84, %v279
  %281 = vmatprep.mubr.f32.mxu0 0.0
  %282 = vmatmul.mubr.f32.gmra.mrb[0].mxu0 %v104
  %v283 = vpop.f32.mrb[0].mxu0
  %v284 = vadd.f32 %v89, %v283
  %v285 = vpop.f32.mrb[0].mxu0
  %v286 = vadd.f32 %v89, %v285
  %287 = vmatprep.mubr.f32.mxu0 0.0
  %288 = vmatmul.mubr.f32.gmra.mrb[0].mxu0 %v107
  %v289 = vpop.f32.mrb[0].mxu0
  %v290 = vadd.f32 %v94, %v289
  %v291 = vpop.f32.mrb[0].mxu0
  %v292 = vadd.f32 %v94, %v291
  %293 = vdwg.mxu0
  %v294 = vtanh.pop %v272
  %v295 = vtanh.pop %v274
  %v296 = vtanh.pop %v278
  %v297 = vtanh.pop %v280
  %v298 = vtanh.pop %v284
  %v299 = vtanh.pop %v286
  %v300 = vtanh.pop %v290
  %v301 = vtanh.pop %v292
  %303 = vset.pattern.permute.xlu0 0
  %304 = vperm.xlu0 %303, %v39
  %v305 = vpop.permute.xlu0 %304
  %308 = vset.pattern.permute.xlu0 0
  %309 = vperm.xlu0 %308, %v40
  %v310 = vpop.permute.xlu0 %309
  %313 = vset.pattern.permute.xlu0 0
  %314 = vperm.xlu0 %313, %v41
  %v315 = vpop.permute.xlu0 %314
  %318 = vset.pattern.permute.xlu0 0
  %319 = vperm.xlu0 %318, %v42
  %v320 = vpop.permute.xlu0 %319
  %vm322 = vcmask 261120
  %v324 = vsel %vm322, %v30, 0
  %v327 = vsel %vm322, %v31, 0
  %v330 = vsel %vm322, %v32, 0
  %v333 = vsel %vm322, %v33, 0
  %335 = vmatprep.subr.mxu0 %v295
  %336 = vmatpush1.msra.mxu0 %v294
  %337 = vmatprep.subr.mxu0 %v297
  %338 = vmatpush1.msra.mxu0 %v296
  %339 = vmatprep.subr.mxu0 %v299
  %340 = vmatpush1.msra.mxu0 %v298
  %341 = vmatprep.subr.mxu0 %v301
  %342 = vmatpush1.msra.mxu0 %v300
  %343 = vmatprep.subr.mxu0 0.0
  %344 = vmatpush1.msra.mxu0 0.0
  %345 = vmatprep.subr.mxu0 0.0
  %346 = vmatpush1.msra.mxu0 0.0
  %347 = vmatprep.subr.mxu0 0.0
  %348 = vmatpush1.msra.mxu0 0.0
  %349 = vmatprep.subr.mxu0 0.0
  %350 = vmatpush1.msra.mxu0 0.0
  %351 = vmatprep.subr.mxu0 0.0
  %352 = vmatpush1.msra.mxu0 0.0
  %353 = vmatprep.subr.mxu0 0.0
  %354 = vmatpush1.msra.mxu0 0.0
  %355 = vmatprep.subr.mxu0 0.0
  %356 = vmatpush1.msra.mxu0 0.0
  %357 = vmatprep.subr.mxu0 0.0
  %358 = vmatpush1.msra.mxu0 0.0
  %359 = vmatprep.subr.mxu0 0.0
  %360 = vmatpush1.msra.mxu0 0.0
  %361 = vmatprep.subr.mxu0 0.0
  %362 = vmatpush1.msra.mxu0 0.0
  %363 = vmatprep.subr.mxu0 0.0
  %364 = vmatpush1.msra.mxu0 0.0
  %365 = vmatprep.subr.mxu0 0.0
  %366 = vmatpush1.msra.mxu0 0.0
  %367 = vmatprep.subr.mxu0 0.0
  %368 = vmatpush1.msra.mxu0 0.0
  %369 = vmatprep.subr.mxu0 0.0
  %370 = vmatpush1.msra.mxu0 0.0
  %371 = vmatprep.subr.mxu0 0.0
  %372 = vmatpush1.msra.mxu0 0.0
  %373 = vmatprep.subr.mxu0 0.0
  %374 = vmatpush1.msra.mxu0 0.0
  %375 = vmatprep.subr.mxu0 0.0
  %376 = vmatpush1.msra.mxu0 0.0
  %377 = vmatprep.subr.mxu0 0.0
  %378 = vmatpush1.msra.mxu0 0.0
  %379 = vmatprep.subr.mxu0 0.0
  %380 = vmatpush1.msra.mxu0 0.0
  %381 = vmatprep.subr.mxu0 0.0
  %382 = vmatpush1.msra.mxu0 0.0
  %383 = vmatprep.subr.mxu0 0.0
  %384 = vmatpush1.msra.mxu0 0.0
  %385 = vmatprep.subr.mxu0 0.0
  %386 = vmatpush1.msra.mxu0 0.0
  %387 = vmatprep.subr.mxu0 0.0
  %388 = vmatpush1.msra.mxu0 0.0
  %389 = vmatprep.subr.mxu0 0.0
  %390 = vmatpush1.msra.mxu0 0.0
  %391 = vmatprep.subr.mxu0 0.0
  %392 = vmatpush1.msra.mxu0 0.0
  %393 = vmatprep.subr.mxu0 0.0
  %394 = vmatpush1.msra.mxu0 0.0
  %395 = vmatprep.subr.mxu0 0.0
  %396 = vmatpush1.msra.mxu0 0.0
  %397 = vmatprep.subr.mxu0 0.0
  %398 = vmatpush1.msra.mxu0 0.0
  %399 = vmatprep.mubr.f32.mxu0 0.0
  %400 = vmatmul.mubr.f32.gmra.mrb[0].mxu0 %v324
  %v401 = vpop.f32.mrb[0].mxu0
  %v402 = vadd.f32 %v305, %v401
  %v403 = vpop.f32.mrb[0].mxu0
  %v404 = vadd.f32 %v305, %v403
  %405 = vmatprep.mubr.f32.mxu0 0.0
  %406 = vmatmul.mubr.f32.gmra.mrb[0].mxu0 %v327
  %v407 = vpop.f32.mrb[0].mxu0
  %v408 = vadd.f32 %v310, %v407
  %v409 = vpop.f32.mrb[0].mxu0
  %v410 = vadd.f32 %v310, %v409
  %411 = vmatprep.mubr.f32.mxu0 0.0
  %412 = vmatmul.mubr.f32.gmra.mrb[0].mxu0 %v330
  %v413 = vpop.f32.mrb[0].mxu0
  %v414 = vadd.f32 %v315, %v413
  %v415 = vpop.f32.mrb[0].mxu0
  %v416 = vadd.f32 %v315, %v415
  %417 = vmatprep.mubr.f32.mxu0 0.0
  %418 = vmatmul.mubr.f32.gmra.mrb[0].mxu0 %v333
  %v419 = vpop.f32.mrb[0].mxu0
  %v420 = vadd.f32 %v320, %v419
  %v421 = vpop.f32.mrb[0].mxu0
  %v422 = vadd.f32 %v320, %v421
  %423 = vdwg.mxu0
  %v424 = vtanh.pop %v402
  %v425 = vtanh.pop %v404
  %v426 = vtanh.pop %v408
  %v427 = vtanh.pop %v410
  %v428 = vtanh.pop %v414
  %v429 = vtanh.pop %v416
  %v430 = vtanh.pop %v420
  %v431 = vtanh.pop %v422
  %432 = vxpose.xlu0.b32.start [1/16] %v424, 128
  %433 = vxpose.xlu0.b32.cont [2/16] %v426, 128
  %434 = vxpose.xlu0.b32.cont [3/16] %v428, 128
  %435 = vxpose.xlu0.b32.cont [4/16] %v430, 128
  %436 = vxpose.xlu0.b32.cont [5/16] 0.0, 128
  %437 = vxpose.xlu0.b32.cont [6/16] 0.0, 128
  %438 = vxpose.xlu0.b32.cont [7/16] 0.0, 128
  %439 = vxpose.xlu0.b32.cont [8/16] 0.0, 128
  %440 = vxpose.xlu0.b32.cont [9/16] 0.0, 128
  %441 = vxpose.xlu0.b32.cont [10/16] 0.0, 128
  %442 = vxpose.xlu0.b32.cont [11/16] 0.0, 128
  %443 = vxpose.xlu0.b32.cont [12/16] 0.0, 128
  %444 = vxpose.xlu0.b32.cont [13/16] 0.0, 128
  %445 = vxpose.xlu0.b32.cont [14/16] 0.0, 128
  %446 = vxpose.xlu0.b32.cont [15/16] 0.0, 128
  %447 = vxpose.xlu0.b32.end [16/16] 0.0, 128
  %v448 = vpop.trf.xlu0
  %v449 = vpop.trf.xlu0
  %v450 = vpop.trf.xlu0
  %v451 = vpop.trf.xlu0
  %v452 = vpop.trf.xlu0
  %v453 = vpop.trf.xlu0
  %v454 = vpop.trf.xlu0
  %v455 = vpop.trf.xlu0
  %v456 = vpop.trf.xlu0
  %v457 = vpop.trf.xlu0
  %v458 = vpop.trf.xlu0
  %v459 = vpop.trf.xlu0
  %v460 = vpop.trf.xlu0
  %v461 = vpop.trf.xlu0
  %v462 = vpop.trf.xlu0
  %v463 = vpop.trf.xlu0
  %464 = vxpose.xlu0.b32.start [1/16] %v425, 128
  %465 = vxpose.xlu0.b32.cont [2/16] %v427, 128
  %466 = vxpose.xlu0.b32.cont [3/16] %v429, 128
  %467 = vxpose.xlu0.b32.cont [4/16] %v431, 128
  %468 = vxpose.xlu0.b32.cont [5/16] 0.0, 128
  %469 = vxpose.xlu0.b32.cont [6/16] 0.0, 128
  %470 = vxpose.xlu0.b32.cont [7/16] 0.0, 128
  %471 = vxpose.xlu0.b32.cont [8/16] 0.0, 128
  %472 = vxpose.xlu0.b32.cont [9/16] 0.0, 128
  %473 = vxpose.xlu0.b32.cont [10/16] 0.0, 128
  %474 = vxpose.xlu0.b32.cont [11/16] 0.0, 128
  %475 = vxpose.xlu0.b32.cont [12/16] 0.0, 128
  %476 = vxpose.xlu0.b32.cont [13/16] 0.0, 128
  %477 = vxpose.xlu0.b32.cont [14/16] 0.0, 128
  %478 = vxpose.xlu0.b32.cont [15/16] 0.0, 128
  %479 = vxpose.xlu0.b32.end [16/16] 0.0, 128
  %v480 = vpop.trf.xlu0
  %v481 = vpop.trf.xlu0
  %v482 = vpop.trf.xlu0
  %v483 = vpop.trf.xlu0
  %v484 = vpop.trf.xlu0
  %v485 = vpop.trf.xlu0
  %v486 = vpop.trf.xlu0
  %v487 = vpop.trf.xlu0
  %v488 = vpop.trf.xlu0
  %v489 = vpop.trf.xlu0
  %v490 = vpop.trf.xlu0
  %v491 = vpop.trf.xlu0
  %v492 = vpop.trf.xlu0
  %v493 = vpop.trf.xlu0
  %v494 = vpop.trf.xlu0
  %v495 = vpop.trf.xlu0
  %v497 = vlaneseq
  %v498 = vshrl.u32 %v497, 7
  %v499 = vsub.s32 0, %v498
  %v500 = vrot.slane %v43, %v499
  %v503 = vsel %vm322, %v448, 0
  %v506 = vsel %vm322, %v449, 0
  %v509 = vsel %vm322, %v450, 0
  %v512 = vsel %vm322, %v451, 0
  %v515 = vsel %vm322, %v452, 0
  %v518 = vsel %vm322, %v453, 0
  %v521 = vsel %vm322, %v454, 0
  %v524 = vsel %vm322, %v455, 0
  %v527 = vsel %vm322, %v456, 0
  %v530 = vsel %vm322, %v457, 0
  %v533 = vsel %vm322, %v458, 0
  %v536 = vsel %vm322, %v459, 0
  %v539 = vsel %vm322, %v460, 0
  %v542 = vsel %vm322, %v461, 0
  %v545 = vsel %vm322, %v462, 0
  %v548 = vsel %vm322, %v463, 0
  %v551 = vsel %vm322, %v480, 0
  %v554 = vsel %vm322, %v481, 0
  %v557 = vsel %vm322, %v482, 0
  %v560 = vsel %vm322, %v483, 0
  %v563 = vsel %vm322, %v484, 0
  %v566 = vsel %vm322, %v485, 0
  %v569 = vsel %vm322, %v486, 0
  %v572 = vsel %vm322, %v487, 0
  %v575 = vsel %vm322, %v488, 0
  %v578 = vsel %vm322, %v489, 0
  %v581 = vsel %vm322, %v490, 0
  %v584 = vsel %vm322, %v491, 0
  %v587 = vsel %vm322, %v492, 0
  %v590 = vsel %vm322, %v493, 0
  %v593 = vsel %vm322, %v494, 0
  %v596 = vsel %vm322, %v495, 0
  %v599 = vsel %vm322, %v34, 0
  %601 = vmatprep.subr.mxu0 0.0
  %602 = vmatpush1.xpose.msra.mxu0 %v599
  %603 = vmatprep.subr.mxu0 0.0
  %604 = vmatpush1.xpose.msra.mxu0 0.0
  %605 = vmatprep.subr.mxu0 0.0
  %606 = vmatpush1.xpose.msra.mxu0 0.0
  %607 = vmatprep.subr.mxu0 0.0
  %608 = vmatpush1.xpose.msra.mxu0 0.0
  %609 = vmatprep.subr.mxu0 0.0
  %610 = vmatpush1.xpose.msra.mxu0 0.0
  %611 = vmatprep.subr.mxu0 0.0
  %612 = vmatpush1.xpose.msra.mxu0 0.0
  %613 = vmatprep.subr.mxu0 0.0
  %614 = vmatpush1.xpose.msra.mxu0 0.0
  %615 = vmatprep.subr.mxu0 0.0
  %616 = vmatpush1.xpose.msra.mxu0 0.0
  %617 = vmatprep.subr.mxu0 0.0
  %618 = vmatpush1.xpose.msra.mxu0 0.0
  %619 = vmatprep.subr.mxu0 0.0
  %620 = vmatpush1.xpose.msra.mxu0 0.0
  %621 = vmatprep.subr.mxu0 0.0
  %622 = vmatpush1.xpose.msra.mxu0 0.0
  %623 = vmatprep.subr.mxu0 0.0
  %624 = vmatpush1.xpose.msra.mxu0 0.0
  %625 = vmatprep.subr.mxu0 0.0
  %626 = vmatpush1.xpose.msra.mxu0 0.0
  %627 = vmatprep.subr.mxu0 0.0
  %628 = vmatpush1.xpose.msra.mxu0 0.0
  %629 = vmatprep.subr.mxu0 0.0
  %630 = vmatpush1.xpose.msra.mxu0 0.0
  %631 = vmatprep.subr.mxu0 0.0
  %632 = vmatpush1.xpose.msra.mxu0 0.0
  %633 = vmatprep.subr.mxu0 0.0
  %634 = vmatpush1.xpose.msra.mxu0 0.0
  %635 = vmatprep.subr.mxu0 0.0
  %636 = vmatpush1.xpose.msra.mxu0 0.0
  %637 = vmatprep.subr.mxu0 0.0
  %638 = vmatpush1.xpose.msra.mxu0 0.0
  %639 = vmatprep.subr.mxu0 0.0
  %640 = vmatpush1.xpose.msra.mxu0 0.0
  %641 = vmatprep.subr.mxu0 0.0
  %642 = vmatpush1.xpose.msra.mxu0 0.0
  %643 = vmatprep.subr.mxu0 0.0
  %644 = vmatpush1.xpose.msra.mxu0 0.0
  %645 = vmatprep.subr.mxu0 0.0
  %646 = vmatpush1.xpose.msra.mxu0 0.0
  %647 = vmatprep.subr.mxu0 0.0
  %648 = vmatpush1.xpose.msra.mxu0 0.0
  %649 = vmatprep.subr.mxu0 0.0
  %650 = vmatpush1.xpose.msra.mxu0 0.0
  %651 = vmatprep.subr.mxu0 0.0
  %652 = vmatpush1.xpose.msra.mxu0 0.0
  %653 = vmatprep.subr.mxu0 0.0
  %654 = vmatpush1.xpose.msra.mxu0 0.0
  %655 = vmatprep.subr.mxu0 0.0
  %656 = vmatpush1.xpose.msra.mxu0 0.0
  %657 = vmatprep.subr.mxu0 0.0
  %658 = vmatpush1.xpose.msra.mxu0 0.0
  %659 = vmatprep.subr.mxu0 0.0
  %660 = vmatpush1.xpose.msra.mxu0 0.0
  %661 = vmatprep.subr.mxu0 0.0
  %662 = vmatpush1.xpose.msra.mxu0 0.0
  %663 = vmatprep.subr.mxu0 0.0
  %664 = vmatpush1.xpose.msra.mxu0 0.0
  %665 = vmatprep.mubr.f32.mxu0 0.0
  %666 = vmatmul.mubr.f32.gmra.mrb[0].mxu0 %v503
  %v667 = vpop.f32.mrb[0].mxu0
  %v668 = vadd.f32 %v500, %v667
  %v669 = vpop.f32.mrb[0].mxu0
  %670 = vmatprep.mubr.f32.mxu0 0.0
  %671 = vmatmul.mubr.f32.gmra.mrb[0].mxu0 %v506
  %v672 = vpop.f32.mrb[0].mxu0
  %v673 = vadd.f32 %v500, %v672
  %v674 = vpop.f32.mrb[0].mxu0
  %675 = vmatprep.mubr.f32.mxu0 0.0
  %676 = vmatmul.mubr.f32.gmra.mrb[0].mxu0 %v509
  %v677 = vpop.f32.mrb[0].mxu0
  %v678 = vadd.f32 %v500, %v677
  %v679 = vpop.f32.mrb[0].mxu0
  %680 = vmatprep.mubr.f32.mxu0 0.0
  %681 = vmatmul.mubr.f32.gmra.mrb[0].mxu0 %v512
  %v682 = vpop.f32.mrb[0].mxu0
  %v683 = vadd.f32 %v500, %v682
  %v684 = vpop.f32.mrb[0].mxu0
  %685 = vmatprep.mubr.f32.mxu0 0.0
  %686 = vmatmul.mubr.f32.gmra.mrb[0].mxu0 %v515
  %v687 = vpop.f32.mrb[0].mxu0
  %v688 = vadd.f32 %v500, %v687
  %v689 = vpop.f32.mrb[0].mxu0
  %690 = vmatprep.mubr.f32.mxu0 0.0
  %691 = vmatmul.mubr.f32.gmra.mrb[0].mxu0 %v518
  %v692 = vpop.f32.mrb[0].mxu0
  %v693 = vadd.f32 %v500, %v692
  %v694 = vpop.f32.mrb[0].mxu0
  %695 = vmatprep.mubr.f32.mxu0 0.0
  %696 = vmatmul.mubr.f32.gmra.mrb[0].mxu0 %v521
  %v697 = vpop.f32.mrb[0].mxu0
  %v698 = vadd.f32 %v500, %v697
  %v699 = vpop.f32.mrb[0].mxu0
  %700 = vmatprep.mubr.f32.mxu0 0.0
  %701 = vmatmul.mubr.f32.gmra.mrb[0].mxu0 %v524
  %v702 = vpop.f32.mrb[0].mxu0
  %v703 = vadd.f32 %v500, %v702
  %v704 = vpop.f32.mrb[0].mxu0
  %705 = vmatprep.mubr.f32.mxu0 0.0
  %706 = vmatmul.mubr.f32.gmra.mrb[0].mxu0 %v527
  %v707 = vpop.f32.mrb[0].mxu0
  %v708 = vadd.f32 %v500, %v707
  %v709 = vpop.f32.mrb[0].mxu0
  %710 = vmatprep.mubr.f32.mxu0 0.0
  %711 = vmatmul.mubr.f32.gmra.mrb[0].mxu0 %v530
  %v712 = vpop.f32.mrb[0].mxu0
  %v713 = vadd.f32 %v500, %v712
  %v714 = vpop.f32.mrb[0].mxu0
  %715 = vmatprep.mubr.f32.mxu0 0.0
  %716 = vmatmul.mubr.f32.gmra.mrb[0].mxu0 %v533
  %v717 = vpop.f32.mrb[0].mxu0
  %v718 = vadd.f32 %v500, %v717
  %v719 = vpop.f32.mrb[0].mxu0
  %720 = vmatprep.mubr.f32.mxu0 0.0
  %721 = vmatmul.mubr.f32.gmra.mrb[0].mxu0 %v536
  %v722 = vpop.f32.mrb[0].mxu0
  %v723 = vadd.f32 %v500, %v722
  %v724 = vpop.f32.mrb[0].mxu0
  %725 = vmatprep.mubr.f32.mxu0 0.0
  %726 = vmatmul.mubr.f32.gmra.mrb[0].mxu0 %v539
  %v727 = vpop.f32.mrb[0].mxu0
  %v728 = vadd.f32 %v500, %v727
  %v729 = vpop.f32.mrb[0].mxu0
  %730 = vmatprep.mubr.f32.mxu0 0.0
  %731 = vmatmul.mubr.f32.gmra.mrb[0].mxu0 %v542
  %v732 = vpop.f32.mrb[0].mxu0
  %v733 = vadd.f32 %v500, %v732
  %v734 = vpop.f32.mrb[0].mxu0
  %735 = vmatprep.mubr.f32.mxu0 0.0
  %736 = vmatmul.mubr.f32.gmra.mrb[0].mxu0 %v545
  %v737 = vpop.f32.mrb[0].mxu0
  %v738 = vadd.f32 %v500, %v737
  %v739 = vpop.f32.mrb[0].mxu0
  %740 = vmatprep.mubr.f32.mxu0 0.0
  %741 = vmatmul.mubr.f32.gmra.mrb[0].mxu0 %v548
  %v742 = vpop.f32.mrb[0].mxu0
  %v743 = vadd.f32 %v500, %v742
  %v744 = vpop.f32.mrb[0].mxu0
  %745 = vmatprep.mubr.f32.mxu0 0.0
  %746 = vmatmul.mubr.f32.gmra.mrb[0].mxu0 %v551
  %v747 = vpop.f32.mrb[0].mxu0
  %v748 = vadd.f32 %v500, %v747
  %v749 = vpop.f32.mrb[0].mxu0
  %750 = vmatprep.mubr.f32.mxu0 0.0
  %751 = vmatmul.mubr.f32.gmra.mrb[0].mxu0 %v554
  %v752 = vpop.f32.mrb[0].mxu0
  %v753 = vadd.f32 %v500, %v752
  %v754 = vpop.f32.mrb[0].mxu0
  %755 = vmatprep.mubr.f32.mxu0 0.0
  %756 = vmatmul.mubr.f32.gmra.mrb[0].mxu0 %v557
  %v757 = vpop.f32.mrb[0].mxu0
  %v758 = vadd.f32 %v500, %v757
  %v759 = vpop.f32.mrb[0].mxu0
  %760 = vmatprep.mubr.f32.mxu0 0.0
  %761 = vmatmul.mubr.f32.gmra.mrb[0].mxu0 %v560
  %v762 = vpop.f32.mrb[0].mxu0
  %v763 = vadd.f32 %v500, %v762
  %v764 = vpop.f32.mrb[0].mxu0
  %765 = vmatprep.mubr.f32.mxu0 0.0
  %766 = vmatmul.mubr.f32.gmra.mrb[0].mxu0 %v563
  %v767 = vpop.f32.mrb[0].mxu0
  %v768 = vadd.f32 %v500, %v767
  %v769 = vpop.f32.mrb[0].mxu0
  %770 = vmatprep.mubr.f32.mxu0 0.0
  %771 = vmatmul.mubr.f32.gmra.mrb[0].mxu0 %v566
  %v772 = vpop.f32.mrb[0].mxu0
  %v773 = vadd.f32 %v500, %v772
  %v774 = vpop.f32.mrb[0].mxu0
  %775 = vmatprep.mubr.f32.mxu0 0.0
  %776 = vmatmul.mubr.f32.gmra.mrb[0].mxu0 %v569
  %v777 = vpop.f32.mrb[0].mxu0
  %v778 = vadd.f32 %v500, %v777
  %v779 = vpop.f32.mrb[0].mxu0
  %780 = vmatprep.mubr.f32.mxu0 0.0
  %781 = vmatmul.mubr.f32.gmra.mrb[0].mxu0 %v572
  %v782 = vpop.f32.mrb[0].mxu0
  %v783 = vadd.f32 %v500, %v782
  %v784 = vpop.f32.mrb[0].mxu0
  %785 = vmatprep.mubr.f32.mxu0 0.0
  %786 = vmatmul.mubr.f32.gmra.mrb[0].mxu0 %v575
  %v787 = vpop.f32.mrb[0].mxu0
  %v788 = vadd.f32 %v500, %v787
  %v789 = vpop.f32.mrb[0].mxu0
  %790 = vmatprep.mubr.f32.mxu0 0.0
  %791 = vmatmul.mubr.f32.gmra.mrb[0].mxu0 %v578
  %v792 = vpop.f32.mrb[0].mxu0
  %v793 = vadd.f32 %v500, %v792
  %v794 = vpop.f32.mrb[0].mxu0
  %795 = vmatprep.mubr.f32.mxu0 0.0
  %796 = vmatmul.mubr.f32.gmra.mrb[0].mxu0 %v581
  %v797 = vpop.f32.mrb[0].mxu0
  %v798 = vadd.f32 %v500, %v797
  %v799 = vpop.f32.mrb[0].mxu0
  %800 = vmatprep.mubr.f32.mxu0 0.0
  %801 = vmatmul.mubr.f32.gmra.mrb[0].mxu0 %v584
  %v802 = vpop.f32.mrb[0].mxu0
  %v803 = vadd.f32 %v500, %v802
  %v804 = vpop.f32.mrb[0].mxu0
  %805 = vmatprep.mubr.f32.mxu0 0.0
  %806 = vmatmul.mubr.f32.gmra.mrb[0].mxu0 %v587
  %v807 = vpop.f32.mrb[0].mxu0
  %v808 = vadd.f32 %v500, %v807
  %v809 = vpop.f32.mrb[0].mxu0
  %810 = vmatprep.mubr.f32.mxu0 0.0
  %811 = vmatmul.mubr.f32.gmra.mrb[0].mxu0 %v590
  %v812 = vpop.f32.mrb[0].mxu0
  %v813 = vadd.f32 %v500, %v812
  %v814 = vpop.f32.mrb[0].mxu0
  %815 = vmatprep.mubr.f32.mxu0 0.0
  %816 = vmatmul.mubr.f32.gmra.mrb[0].mxu0 %v593
  %v817 = vpop.f32.mrb[0].mxu0
  %v818 = vadd.f32 %v500, %v817
  %v819 = vpop.f32.mrb[0].mxu0
  %820 = vmatprep.mubr.f32.mxu0 0.0
  %821 = vmatmul.mubr.f32.gmra.mrb[0].mxu0 %v596
  %v822 = vpop.f32.mrb[0].mxu0
  %v823 = vadd.f32 %v500, %v822
  %v824 = vpop.f32.mrb[0].mxu0
  %825 = vdwg.mxu0
  %vm826 = vcmask 31744
  %827 = vst.msk [vmem:[%s7] sm:$0xff] %vm826, %v668
  %828 = vst.msk [vmem:[%s7 + $0x8] sm:$0xff] %vm826, %v673
  %829 = vst.msk [vmem:[%s7 + $0x10] sm:$0xff] %vm826, %v678
  %830 = vst.msk [vmem:[%s7 + $0x18] sm:$0xff] %vm826, %v683
  %831 = vst.msk [vmem:[%s7 + $0x20] sm:$0xff] %vm826, %v688
  %832 = vst.msk [vmem:[%s7 + $0x28] sm:$0xff] %vm826, %v693
  %833 = vst.msk [vmem:[%s7 + $0x30] sm:$0xff] %vm826, %v698
  %834 = vst.msk [vmem:[%s7 + $0x38] sm:$0xff] %vm826, %v703
  %835 = vst.msk [vmem:[%s7 + $0x40] sm:$0xff] %vm826, %v708
  %836 = vst.msk [vmem:[%s7 + $0x48] sm:$0xff] %vm826, %v713
  %837 = vst.msk [vmem:[%s7 + $0x50] sm:$0xff] %vm826, %v718
  %838 = vst.msk [vmem:[%s7 + $0x58] sm:$0xff] %vm826, %v723
  %839 = vst.msk [vmem:[%s7 + $0x60] sm:$0xff] %vm826, %v728
  %840 = vst.msk [vmem:[%s7 + $0x68] sm:$0xff] %vm826, %v733
  %841 = vst.msk [vmem:[%s7 + $0x70] sm:$0xff] %vm826, %v738
  %842 = vst.msk [vmem:[%s7 + $0x78] sm:$0xff] %vm826, %v743
  %843 = vst.msk [vmem:[%s7 + $0x80] sm:$0xff] %vm826, %v748
  %844 = vst.msk [vmem:[%s7 + $0x88] sm:$0xff] %vm826, %v753
  %845 = vst.msk [vmem:[%s7 + $0x90] sm:$0xff] %vm826, %v758
  %846 = vst.msk [vmem:[%s7 + $0x98] sm:$0xff] %vm826, %v763
  %847 = vst.msk [vmem:[%s7 + $0xa0] sm:$0xff] %vm826, %v768
  %848 = vst.msk [vmem:[%s7 + $0xa8] sm:$0xff] %vm826, %v773
  %849 = vst.msk [vmem:[%s7 + $0xb0] sm:$0xff] %vm826, %v778
  %850 = vst.msk [vmem:[%s7 + $0xb8] sm:$0xff] %vm826, %v783
  %851 = vst.msk [vmem:[%s7 + $0xc0] sm:$0xff] %vm826, %v788
  %852 = vst.msk [vmem:[%s7 + $0xc8] sm:$0xff] %vm826, %v793
  %853 = vst.msk [vmem:[%s7 + $0xd0] sm:$0xff] %vm826, %v798
  %854 = vst.msk [vmem:[%s7 + $0xd8] sm:$0xff] %vm826, %v803
  %855 = vst.msk [vmem:[%s7 + $0xe0] sm:$0xff] %vm826, %v808
  %856 = vst.msk [vmem:[%s7 + $0xe8] sm:$0xff] %vm826, %v813
  %857 = vst.msk [vmem:[%s7 + $0xf0] sm:$0xff] %vm826, %v818
  %858 = vst.msk [vmem:[%s7 + $0xf8] sm:$0xff] %vm826, %v823
  // Predicated region
  $region30: #{tpu_custom_call.1} parent=0 // pred_check
    _
  $region31: #{tpu_custom_call.1} parent=0 // pred_check_branch
    %860 = sbr.rel (0) target = $region33
  $region32: #{tpu_custom_call.1} parent=0 // pred_region
    _
  $region33: #{tpu_custom_call.1} parent=0 // pred_fallthru
    _
  // Predicated region
  $region34: #{tpu_custom_call.1} parent=0 // pred_check
    _
  $region35: #{tpu_custom_call.1} parent=0 // pred_check_branch
    %862 = sbr.rel (0) target = $region37
  $region36: #{tpu_custom_call.1} parent=0 // pred_region
    _
  $region37: #{tpu_custom_call.1} parent=0 // pred_fallthru
    _

// kernel: tpu_custom_call.1
$region0: #{tpu_custom_call.1}
  #allocation0 [shape = 'u32[]', space=smem, size = 0x4, offset = 0x4, fixed_abs, tag = 'smem constant byte address 0x4 - core index']
  #allocation1 [shape = 'u32[144,128]{1,0:T(1,128)}', space=vmem, size = 0x12000, scoped, tag = 'internal scratch']
  %s0 = inlined_call_operand.vmem [shape: f32[256,16], index: 0, kind: input, shape index: {}]
  %s1 = inlined_call_operand.vmem [shape: f32[32,16], index: 1, kind: input, shape index: {}]
  %s2 = inlined_call_operand.vmem [shape: f32[32,1], index: 2, kind: input, shape index: {}]
  %s3 = inlined_call_operand.vmem [shape: f32[32,32], index: 3, kind: input, shape index: {}]
  %s4 = inlined_call_operand.vmem [shape: f32[32,1], index: 4, kind: input, shape index: {}]
  %s5 = inlined_call_operand.vmem [shape: f32[4,32], index: 5, kind: input, shape index: {}]
  %s6 = inlined_call_operand.vmem [shape: f32[1,4], index: 6, kind: input, shape index: {}]
  %s7 = inlined_call_operand.vmem [shape: f32[256,4], index: 7, kind: output, shape index: {}]
  %s8 = sld [smem:[#allocation0]]
  $region38: #{tpu_custom_call.1} parent=0
    _
  %s10 = ssub.s32 1, %s8
  %s11 = scalar_select 0, %s10, %s8
  // Predicated region
  $region2: #{tpu_custom_call.1} parent=0 // pred_check
    _
  $region3: #{tpu_custom_call.1} parent=0 // pred_check_branch
    %13 = sbr.rel (0) target = $region5
  $region4: #{tpu_custom_call.1} parent=0 // pred_region
    _
  $region5: #{tpu_custom_call.1} parent=0 // pred_fallthru
    _
  // Predicated region
  $region6: #{tpu_custom_call.1} parent=0 // pred_check
    _
  $region7: #{tpu_custom_call.1} parent=0 // pred_check_branch
    %15 = sbr.rel (0) target = $region9
  $region8: #{tpu_custom_call.1} parent=0 // pred_region
    _
  $region9: #{tpu_custom_call.1} parent=0 // pred_fallthru
    _
  // Predicated region
  $region10: #{tpu_custom_call.1} parent=0 // pred_check
    _
  $region11: #{tpu_custom_call.1} parent=0 // pred_check_branch
    %17 = sbr.rel (0) target = $region13
  $region12: #{tpu_custom_call.1} parent=0 // pred_region
    _
  $region13: #{tpu_custom_call.1} parent=0 // pred_fallthru
    _
  // Predicated region
  $region14: #{tpu_custom_call.1} parent=0 // pred_check
    _
  $region15: #{tpu_custom_call.1} parent=0 // pred_check_branch
    %19 = sbr.rel (0) target = $region17
  $region16: #{tpu_custom_call.1} parent=0 // pred_region
    _
  $region17: #{tpu_custom_call.1} parent=0 // pred_fallthru
    _
  // Predicated region
  $region18: #{tpu_custom_call.1} parent=0 // pred_check
    _
  $region19: #{tpu_custom_call.1} parent=0 // pred_check_branch
    %21 = sbr.rel (0) target = $region21
  $region20: #{tpu_custom_call.1} parent=0 // pred_region
    _
  $region21: #{tpu_custom_call.1} parent=0 // pred_fallthru
    _
  // Predicated region
  $region22: #{tpu_custom_call.1} parent=0 // pred_check
    _
  $region23: #{tpu_custom_call.1} parent=0 // pred_check_branch
    %23 = sbr.rel (0) target = $region25
  $region24: #{tpu_custom_call.1} parent=0 // pred_region
    _
  $region25: #{tpu_custom_call.1} parent=0 // pred_fallthru
    _
  // Predicated region
  $region26: #{tpu_custom_call.1} parent=0 // pred_check
    _
  $region27: #{tpu_custom_call.1} parent=0 // pred_check_branch
    %25 = sbr.rel (0) target = $region29
  $region28: #{tpu_custom_call.1} parent=0 // pred_region
    _
  $region29: #{tpu_custom_call.1} parent=0 // pred_fallthru
    _
  %v26 = vld [vmem:[%s1] sm:$0xff]
  %v27 = vld [vmem:[%s1 + $0x8] sm:$0xff]
  %v28 = vld [vmem:[%s1 + $0x10] sm:$0xff]
  %v29 = vld [vmem:[%s1 + $0x18] sm:$0xff]
  %v30 = vld [vmem:[%s3] sm:$0xff]
  %v31 = vld [vmem:[%s3 + $0x8] sm:$0xff]
  %v32 = vld [vmem:[%s3 + $0x10] sm:$0xff]
  %v33 = vld [vmem:[%s3 + $0x18] sm:$0xff]
  %v34 = vld [vmem:[%s5] sm:$0xf]
  %v35 = vld [vmem:[%s2] sm:$0xff]
  %v36 = vld [vmem:[%s2 + $0x8] sm:$0xff]
  %v37 = vld [vmem:[%s2 + $0x10] sm:$0xff]
  %v38 = vld [vmem:[%s2 + $0x18] sm:$0xff]
  %v39 = vld [vmem:[%s4] sm:$0xff]
  %v40 = vld [vmem:[%s4 + $0x8] sm:$0xff]
  %v41 = vld [vmem:[%s4 + $0x10] sm:$0xff]
  %v42 = vld [vmem:[%s4 + $0x18] sm:$0xff]
  %v43 = vld [vmem:[%s6] sm:$0x1]
  %v44 = vld [vmem:[%s0] sm:$0xff]
  %v45 = vld [vmem:[%s0 + $0x8] sm:$0xff]
  %v46 = vld [vmem:[%s0 + $0x10] sm:$0xff]
  %v47 = vld [vmem:[%s0 + $0x18] sm:$0xff]
  %v48 = vld [vmem:[%s0 + $0x20] sm:$0xff]
  %v49 = vld [vmem:[%s0 + $0x28] sm:$0xff]
  %v50 = vld [vmem:[%s0 + $0x30] sm:$0xff]
  %v51 = vld [vmem:[%s0 + $0x38] sm:$0xff]
  %v52 = vld [vmem:[%s0 + $0x40] sm:$0xff]
  %v53 = vld [vmem:[%s0 + $0x48] sm:$0xff]
  %v54 = vld [vmem:[%s0 + $0x50] sm:$0xff]
  %v55 = vld [vmem:[%s0 + $0x58] sm:$0xff]
  %v56 = vld [vmem:[%s0 + $0x60] sm:$0xff]
  %v57 = vld [vmem:[%s0 + $0x68] sm:$0xff]
  %v58 = vld [vmem:[%s0 + $0x70] sm:$0xff]
  %v59 = vld [vmem:[%s0 + $0x78] sm:$0xff]
  %v60 = vld [vmem:[%s0 + $0x80] sm:$0xff]
  %v61 = vld [vmem:[%s0 + $0x88] sm:$0xff]
  %v62 = vld [vmem:[%s0 + $0x90] sm:$0xff]
  %v63 = vld [vmem:[%s0 + $0x98] sm:$0xff]
  %v64 = vld [vmem:[%s0 + $0xa0] sm:$0xff]
  %v65 = vld [vmem:[%s0 + $0xa8] sm:$0xff]
  %v66 = vld [vmem:[%s0 + $0xb0] sm:$0xff]
  %v67 = vld [vmem:[%s0 + $0xb8] sm:$0xff]
  %v68 = vld [vmem:[%s0 + $0xc0] sm:$0xff]
  %v69 = vld [vmem:[%s0 + $0xc8] sm:$0xff]
  %v70 = vld [vmem:[%s0 + $0xd0] sm:$0xff]
  %v71 = vld [vmem:[%s0 + $0xd8] sm:$0xff]
  %v72 = vld [vmem:[%s0 + $0xe0] sm:$0xff]
  %v73 = vld [vmem:[%s0 + $0xe8] sm:$0xff]
  %v74 = vld [vmem:[%s0 + $0xf0] sm:$0xff]
  %v75 = vld [vmem:[%s0 + $0xf8] sm:$0xff]
  %77 = vset.pattern.permute.xlu0 0
  %78 = vperm.xlu0 %77, %v35
  %v79 = vpop.permute.xlu0 %78
  %82 = vset.pattern.permute.xlu0 0
  %83 = vperm.xlu0 %82, %v36
  %v84 = vpop.permute.xlu0 %83
  %87 = vset.pattern.permute.xlu0 0
  %88 = vperm.xlu0 %87, %v37
  %v89 = vpop.permute.xlu0 %88
  %92 = vset.pattern.permute.xlu0 0
  %93 = vperm.xlu0 %92, %v38
  %v94 = vpop.permute.xlu0 %93
  %vm96 = vcmask 130048
  %v98 = vsel %vm96, %v26, 0
  %v101 = vsel %vm96, %v27, 0
  %v104 = vsel %vm96, %v28, 0
  %v107 = vsel %vm96, %v29, 0
  %v110 = vsel %vm96, %v44, 0
  %v113 = vsel %vm96, %v45, 0
  %v116 = vsel %vm96, %v46, 0
  %v119 = vsel %vm96, %v47, 0
  %v122 = vsel %vm96, %v48, 0
  %v125 = vsel %vm96, %v49, 0
  %v128 = vsel %vm96, %v50, 0
  %v131 = vsel %vm96, %v51, 0
  %v134 = vsel %vm96, %v52, 0
  %v137 = vsel %vm96, %v53, 0
  %v140 = vsel %vm96, %v54, 0
  %v143 = vsel %vm96, %v55, 0
  %v146 = vsel %vm96, %v56, 0
  %v149 = vsel %vm96, %v57, 0
  %v152 = vsel %vm96, %v58, 0
  %v155 = vsel %vm96, %v59, 0
  %v158 = vsel %vm96, %v60, 0
  %v161 = vsel %vm96, %v61, 0
  %v164 = vsel %vm96, %v62, 0
  %v167 = vsel %vm96, %v63, 0
  %v170 = vsel %vm96, %v64, 0
  %v173 = vsel %vm96, %v65, 0
  %v176 = vsel %vm96, %v66, 0
  %v179 = vsel %vm96, %v67, 0
  %v182 = vsel %vm96, %v68, 0
  %v185 = vsel %vm96, %v69, 0
  %v188 = vsel %vm96, %v70, 0
  %v191 = vsel %vm96, %v71, 0
  %v194 = vsel %vm96, %v72, 0
  %v197 = vsel %vm96, %v73, 0
  %v200 = vsel %vm96, %v74, 0
  %v203 = vsel %vm96, %v75, 0
  %205 = vmatprep.subr.mxu0 0.0
  %206 = vmatpush1.xpose.msra.mxu0 %v110
  %207 = vmatprep.subr.mxu0 0.0
  %208 = vmatpush1.xpose.msra.mxu0 %v113
  %209 = vmatprep.subr.mxu0 0.0
  %210 = vmatpush1.xpose.msra.mxu0 %v116
  %211 = vmatprep.subr.mxu0 0.0
  %212 = vmatpush1.xpose.msra.mxu0 %v119
  %213 = vmatprep.subr.mxu0 0.0
  %214 = vmatpush1.xpose.msra.mxu0 %v122
  %215 = vmatprep.subr.mxu0 0.0
  %216 = vmatpush1.xpose.msra.mxu0 %v125
  %217 = vmatprep.subr.mxu0 0.0
  %218 = vmatpush1.xpose.msra.mxu0 %v128
  %219 = vmatprep.subr.mxu0 0.0
  %220 = vmatpush1.xpose.msra.mxu0 %v131
  %221 = vmatprep.subr.mxu0 0.0
  %222 = vmatpush1.xpose.msra.mxu0 %v134
  %223 = vmatprep.subr.mxu0 0.0
  %224 = vmatpush1.xpose.msra.mxu0 %v137
  %225 = vmatprep.subr.mxu0 0.0
  %226 = vmatpush1.xpose.msra.mxu0 %v140
  %227 = vmatprep.subr.mxu0 0.0
  %228 = vmatpush1.xpose.msra.mxu0 %v143
  %229 = vmatprep.subr.mxu0 0.0
  %230 = vmatpush1.xpose.msra.mxu0 %v146
  %231 = vmatprep.subr.mxu0 0.0
  %232 = vmatpush1.xpose.msra.mxu0 %v149
  %233 = vmatprep.subr.mxu0 0.0
  %234 = vmatpush1.xpose.msra.mxu0 %v152
  %235 = vmatprep.subr.mxu0 0.0
  %236 = vmatpush1.xpose.msra.mxu0 %v155
  %237 = vmatprep.subr.mxu0 0.0
  %238 = vmatpush1.xpose.msra.mxu0 %v158
  %239 = vmatprep.subr.mxu0 0.0
  %240 = vmatpush1.xpose.msra.mxu0 %v161
  %241 = vmatprep.subr.mxu0 0.0
  %242 = vmatpush1.xpose.msra.mxu0 %v164
  %243 = vmatprep.subr.mxu0 0.0
  %244 = vmatpush1.xpose.msra.mxu0 %v167
  %245 = vmatprep.subr.mxu0 0.0
  %246 = vmatpush1.xpose.msra.mxu0 %v170
  %247 = vmatprep.subr.mxu0 0.0
  %248 = vmatpush1.xpose.msra.mxu0 %v173
  %249 = vmatprep.subr.mxu0 0.0
  %250 = vmatpush1.xpose.msra.mxu0 %v176
  %251 = vmatprep.subr.mxu0 0.0
  %252 = vmatpush1.xpose.msra.mxu0 %v179
  %253 = vmatprep.subr.mxu0 0.0
  %254 = vmatpush1.xpose.msra.mxu0 %v182
  %255 = vmatprep.subr.mxu0 0.0
  %256 = vmatpush1.xpose.msra.mxu0 %v185
  %257 = vmatprep.subr.mxu0 0.0
  %258 = vmatpush1.xpose.msra.mxu0 %v188
  %259 = vmatprep.subr.mxu0 0.0
  %260 = vmatpush1.xpose.msra.mxu0 %v191
  %261 = vmatprep.subr.mxu0 0.0
  %262 = vmatpush1.xpose.msra.mxu0 %v194
  %263 = vmatprep.subr.mxu0 0.0
  %264 = vmatpush1.xpose.msra.mxu0 %v197
  %265 = vmatprep.subr.mxu0 0.0
  %266 = vmatpush1.xpose.msra.mxu0 %v200
  %267 = vmatprep.subr.mxu0 0.0
  %268 = vmatpush1.xpose.msra.mxu0 %v203
  %269 = vmatprep.mubr.f32.mxu0 0.0
  %270 = vmatmul.mubr.f32.gmra.mrb[0].mxu0 %v98
  %v271 = vpop.f32.mrb[0].mxu0
  %v272 = vadd.f32 %v79, %v271
  %v273 = vpop.f32.mrb[0].mxu0
  %v274 = vadd.f32 %v79, %v273
  %275 = vmatprep.mubr.f32.mxu0 0.0
  %276 = vmatmul.mubr.f32.gmra.mrb[0].mxu0 %v101
  %v277 = vpop.f32.mrb[0].mxu0
  %v278 = vadd.f32 %v84, %v277
  %v279 = vpop.f32.mrb[0].mxu0
  %v280 = vadd.f32 %v84, %v279
  %281 = vmatprep.mubr.f32.mxu0 0.0
  %282 = vmatmul.mubr.f32.gmra.mrb[0].mxu0 %v104
  %v283 = vpop.f32.mrb[0].mxu0
  %v284 = vadd.f32 %v89, %v283
  %v285 = vpop.f32.mrb[0].mxu0
  %v286 = vadd.f32 %v89, %v285
  %287 = vmatprep.mubr.f32.mxu0 0.0
  %288 = vmatmul.mubr.f32.gmra.mrb[0].mxu0 %v107
  %v289 = vpop.f32.mrb[0].mxu0
  %v290 = vadd.f32 %v94, %v289
  %v291 = vpop.f32.mrb[0].mxu0
  %v292 = vadd.f32 %v94, %v291
  %293 = vdwg.mxu0
  %v294 = vtanh.pop %v272
  %v295 = vtanh.pop %v274
  %v296 = vtanh.pop %v278
  %v297 = vtanh.pop %v280
  %v298 = vtanh.pop %v284
  %v299 = vtanh.pop %v286
  %v300 = vtanh.pop %v290
  %v301 = vtanh.pop %v292
  %303 = vset.pattern.permute.xlu0 0
  %304 = vperm.xlu0 %303, %v39
  %v305 = vpop.permute.xlu0 %304
  %308 = vset.pattern.permute.xlu0 0
  %309 = vperm.xlu0 %308, %v40
  %v310 = vpop.permute.xlu0 %309
  %313 = vset.pattern.permute.xlu0 0
  %314 = vperm.xlu0 %313, %v41
  %v315 = vpop.permute.xlu0 %314
  %318 = vset.pattern.permute.xlu0 0
  %319 = vperm.xlu0 %318, %v42
  %v320 = vpop.permute.xlu0 %319
  %vm322 = vcmask 261120
  %v324 = vsel %vm322, %v30, 0
  %v327 = vsel %vm322, %v31, 0
  %v330 = vsel %vm322, %v32, 0
  %v333 = vsel %vm322, %v33, 0
  %335 = vmatprep.subr.mxu0 %v295
  %336 = vmatpush1.msra.mxu0 %v294
  %337 = vmatprep.subr.mxu0 %v297
  %338 = vmatpush1.msra.mxu0 %v296
  %339 = vmatprep.subr.mxu0 %v299
  %340 = vmatpush1.msra.mxu0 %v298
  %341 = vmatprep.subr.mxu0 %v301
  %342 = vmatpush1.msra.mxu0 %v300
  %343 = vmatprep.subr.mxu0 0.0
  %344 = vmatpush1.msra.mxu0 0.0
  %345 = vmatprep.subr.mxu0 0.0
  %346 = vmatpush1.msra.mxu0 0.0
  %347 = vmatprep.subr.mxu0 0.0
  %348 = vmatpush1.msra.mxu0 0.0
  %349 = vmatprep.subr.mxu0 0.0
  %350 = vmatpush1.msra.mxu0 0.0
  %351 = vmatprep.subr.mxu0 0.0
  %352 = vmatpush1.msra.mxu0 0.0
  %353 = vmatprep.subr.mxu0 0.0
  %354 = vmatpush1.msra.mxu0 0.0
  %355 = vmatprep.subr.mxu0 0.0
  %356 = vmatpush1.msra.mxu0 0.0
  %357 = vmatprep.subr.mxu0 0.0
  %358 = vmatpush1.msra.mxu0 0.0
  %359 = vmatprep.subr.mxu0 0.0
  %360 = vmatpush1.msra.mxu0 0.0
  %361 = vmatprep.subr.mxu0 0.0
  %362 = vmatpush1.msra.mxu0 0.0
  %363 = vmatprep.subr.mxu0 0.0
  %364 = vmatpush1.msra.mxu0 0.0
  %365 = vmatprep.subr.mxu0 0.0
  %366 = vmatpush1.msra.mxu0 0.0
  %367 = vmatprep.subr.mxu0 0.0
  %368 = vmatpush1.msra.mxu0 0.0
  %369 = vmatprep.subr.mxu0 0.0
  %370 = vmatpush1.msra.mxu0 0.0
  %371 = vmatprep.subr.mxu0 0.0
  %372 = vmatpush1.msra.mxu0 0.0
  %373 = vmatprep.subr.mxu0 0.0
  %374 = vmatpush1.msra.mxu0 0.0
  %375 = vmatprep.subr.mxu0 0.0
  %376 = vmatpush1.msra.mxu0 0.0
  %377 = vmatprep.subr.mxu0 0.0
  %378 = vmatpush1.msra.mxu0 0.0
  %379 = vmatprep.subr.mxu0 0.0
  %380 = vmatpush1.msra.mxu0 0.0
  %381 = vmatprep.subr.mxu0 0.0
  %382 = vmatpush1.msra.mxu0 0.0
  %383 = vmatprep.subr.mxu0 0.0
  %384 = vmatpush1.msra.mxu0 0.0
  %385 = vmatprep.subr.mxu0 0.0
  %386 = vmatpush1.msra.mxu0 0.0
  %387 = vmatprep.subr.mxu0 0.0
  %388 = vmatpush1.msra.mxu0 0.0
  %389 = vmatprep.subr.mxu0 0.0
  %390 = vmatpush1.msra.mxu0 0.0
  %391 = vmatprep.subr.mxu0 0.0
  %392 = vmatpush1.msra.mxu0 0.0
  %393 = vmatprep.subr.mxu0 0.0
  %394 = vmatpush1.msra.mxu0 0.0
  %395 = vmatprep.subr.mxu0 0.0
  %396 = vmatpush1.msra.mxu0 0.0
  %397 = vmatprep.subr.mxu0 0.0
  %398 = vmatpush1.msra.mxu0 0.0
  %399 = vmatprep.mubr.f32.mxu0 0.0
  %400 = vmatmul.mubr.f32.gmra.mrb[0].mxu0 %v324
  %v401 = vpop.f32.mrb[0].mxu0
  %v402 = vadd.f32 %v305, %v401
  %v403 = vpop.f32.mrb[0].mxu0
  %v404 = vadd.f32 %v305, %v403
  %405 = vmatprep.mubr.f32.mxu0 0.0
  %406 = vmatmul.mubr.f32.gmra.mrb[0].mxu0 %v327
  %v407 = vpop.f32.mrb[0].mxu0
  %v408 = vadd.f32 %v310, %v407
  %v409 = vpop.f32.mrb[0].mxu0
  %v410 = vadd.f32 %v310, %v409
  %411 = vmatprep.mubr.f32.mxu0 0.0
  %412 = vmatmul.mubr.f32.gmra.mrb[0].mxu0 %v330
  %v413 = vpop.f32.mrb[0].mxu0
  %v414 = vadd.f32 %v315, %v413
  %v415 = vpop.f32.mrb[0].mxu0
  %v416 = vadd.f32 %v315, %v415
  %417 = vmatprep.mubr.f32.mxu0 0.0
  %418 = vmatmul.mubr.f32.gmra.mrb[0].mxu0 %v333
  %v419 = vpop.f32.mrb[0].mxu0
  %v420 = vadd.f32 %v320, %v419
  %v421 = vpop.f32.mrb[0].mxu0
  %v422 = vadd.f32 %v320, %v421
  %423 = vdwg.mxu0
  %v424 = vtanh.pop %v402
  %v425 = vtanh.pop %v404
  %v426 = vtanh.pop %v408
  %v427 = vtanh.pop %v410
  %v428 = vtanh.pop %v414
  %v429 = vtanh.pop %v416
  %v430 = vtanh.pop %v420
  %v431 = vtanh.pop %v422
  %432 = vxpose.xlu0.b32.start [1/16] %v424, 128
  %433 = vxpose.xlu0.b32.cont [2/16] %v426, 128
  %434 = vxpose.xlu0.b32.cont [3/16] %v428, 128
  %435 = vxpose.xlu0.b32.cont [4/16] %v430, 128
  %436 = vxpose.xlu0.b32.cont [5/16] 0.0, 128
  %437 = vxpose.xlu0.b32.cont [6/16] 0.0, 128
  %438 = vxpose.xlu0.b32.cont [7/16] 0.0, 128
  %439 = vxpose.xlu0.b32.cont [8/16] 0.0, 128
  %440 = vxpose.xlu0.b32.cont [9/16] 0.0, 128
  %441 = vxpose.xlu0.b32.cont [10/16] 0.0, 128
  %442 = vxpose.xlu0.b32.cont [11/16] 0.0, 128
  %443 = vxpose.xlu0.b32.cont [12/16] 0.0, 128
  %444 = vxpose.xlu0.b32.cont [13/16] 0.0, 128
  %445 = vxpose.xlu0.b32.cont [14/16] 0.0, 128
  %446 = vxpose.xlu0.b32.cont [15/16] 0.0, 128
  %447 = vxpose.xlu0.b32.end [16/16] 0.0, 128
  %v448 = vpop.trf.xlu0
  %v449 = vpop.trf.xlu0
  %v450 = vpop.trf.xlu0
  %v451 = vpop.trf.xlu0
  %v452 = vpop.trf.xlu0
  %v453 = vpop.trf.xlu0
  %v454 = vpop.trf.xlu0
  %v455 = vpop.trf.xlu0
  %v456 = vpop.trf.xlu0
  %v457 = vpop.trf.xlu0
  %v458 = vpop.trf.xlu0
  %v459 = vpop.trf.xlu0
  %v460 = vpop.trf.xlu0
  %v461 = vpop.trf.xlu0
  %v462 = vpop.trf.xlu0
  %v463 = vpop.trf.xlu0
  %464 = vxpose.xlu0.b32.start [1/16] %v425, 128
  %465 = vxpose.xlu0.b32.cont [2/16] %v427, 128
  %466 = vxpose.xlu0.b32.cont [3/16] %v429, 128
  %467 = vxpose.xlu0.b32.cont [4/16] %v431, 128
  %468 = vxpose.xlu0.b32.cont [5/16] 0.0, 128
  %469 = vxpose.xlu0.b32.cont [6/16] 0.0, 128
  %470 = vxpose.xlu0.b32.cont [7/16] 0.0, 128
  %471 = vxpose.xlu0.b32.cont [8/16] 0.0, 128
  %472 = vxpose.xlu0.b32.cont [9/16] 0.0, 128
  %473 = vxpose.xlu0.b32.cont [10/16] 0.0, 128
  %474 = vxpose.xlu0.b32.cont [11/16] 0.0, 128
  %475 = vxpose.xlu0.b32.cont [12/16] 0.0, 128
  %476 = vxpose.xlu0.b32.cont [13/16] 0.0, 128
  %477 = vxpose.xlu0.b32.cont [14/16] 0.0, 128
  %478 = vxpose.xlu0.b32.cont [15/16] 0.0, 128
  %479 = vxpose.xlu0.b32.end [16/16] 0.0, 128
  %v480 = vpop.trf.xlu0
  %v481 = vpop.trf.xlu0
  %v482 = vpop.trf.xlu0
  %v483 = vpop.trf.xlu0
  %v484 = vpop.trf.xlu0
  %v485 = vpop.trf.xlu0
  %v486 = vpop.trf.xlu0
  %v487 = vpop.trf.xlu0
  %v488 = vpop.trf.xlu0
  %v489 = vpop.trf.xlu0
  %v490 = vpop.trf.xlu0
  %v491 = vpop.trf.xlu0
  %v492 = vpop.trf.xlu0
  %v493 = vpop.trf.xlu0
  %v494 = vpop.trf.xlu0
  %v495 = vpop.trf.xlu0
  %v497 = vlaneseq
  %v498 = vshrl.u32 %v497, 7
  %v499 = vsub.s32 0, %v498
  %v500 = vrot.slane %v43, %v499
  %v503 = vsel %vm322, %v448, 0
  %v506 = vsel %vm322, %v449, 0
  %v509 = vsel %vm322, %v450, 0
  %v512 = vsel %vm322, %v451, 0
  %v515 = vsel %vm322, %v452, 0
  %v518 = vsel %vm322, %v453, 0
  %v521 = vsel %vm322, %v454, 0
  %v524 = vsel %vm322, %v455, 0
  %v527 = vsel %vm322, %v456, 0
  %v530 = vsel %vm322, %v457, 0
  %v533 = vsel %vm322, %v458, 0
  %v536 = vsel %vm322, %v459, 0
  %v539 = vsel %vm322, %v460, 0
  %v542 = vsel %vm322, %v461, 0
  %v545 = vsel %vm322, %v462, 0
  %v548 = vsel %vm322, %v463, 0
  %v551 = vsel %vm322, %v480, 0
  %v554 = vsel %vm322, %v481, 0
  %v557 = vsel %vm322, %v482, 0
  %v560 = vsel %vm322, %v483, 0
  %v563 = vsel %vm322, %v484, 0
  %v566 = vsel %vm322, %v485, 0
  %v569 = vsel %vm322, %v486, 0
  %v572 = vsel %vm322, %v487, 0
  %v575 = vsel %vm322, %v488, 0
  %v578 = vsel %vm322, %v489, 0
  %v581 = vsel %vm322, %v490, 0
  %v584 = vsel %vm322, %v491, 0
  %v587 = vsel %vm322, %v492, 0
  %v590 = vsel %vm322, %v493, 0
  %v593 = vsel %vm322, %v494, 0
  %v596 = vsel %vm322, %v495, 0
  %v599 = vsel %vm322, %v34, 0
  %601 = vmatprep.subr.mxu0 0.0
  %602 = vmatpush1.xpose.msra.mxu0 %v599
  %603 = vmatprep.subr.mxu0 0.0
  %604 = vmatpush1.xpose.msra.mxu0 0.0
  %605 = vmatprep.subr.mxu0 0.0
  %606 = vmatpush1.xpose.msra.mxu0 0.0
  %607 = vmatprep.subr.mxu0 0.0
  %608 = vmatpush1.xpose.msra.mxu0 0.0
  %609 = vmatprep.subr.mxu0 0.0
  %610 = vmatpush1.xpose.msra.mxu0 0.0
  %611 = vmatprep.subr.mxu0 0.0
  %612 = vmatpush1.xpose.msra.mxu0 0.0
  %613 = vmatprep.subr.mxu0 0.0
  %614 = vmatpush1.xpose.msra.mxu0 0.0
  %615 = vmatprep.subr.mxu0 0.0
  %616 = vmatpush1.xpose.msra.mxu0 0.0
  %617 = vmatprep.subr.mxu0 0.0
  %618 = vmatpush1.xpose.msra.mxu0 0.0
  %619 = vmatprep.subr.mxu0 0.0
  %620 = vmatpush1.xpose.msra.mxu0 0.0
  %621 = vmatprep.subr.mxu0 0.0
  %622 = vmatpush1.xpose.msra.mxu0 0.0
  %623 = vmatprep.subr.mxu0 0.0
  %624 = vmatpush1.xpose.msra.mxu0 0.0
  %625 = vmatprep.subr.mxu0 0.0
  %626 = vmatpush1.xpose.msra.mxu0 0.0
  %627 = vmatprep.subr.mxu0 0.0
  %628 = vmatpush1.xpose.msra.mxu0 0.0
  %629 = vmatprep.subr.mxu0 0.0
  %630 = vmatpush1.xpose.msra.mxu0 0.0
  %631 = vmatprep.subr.mxu0 0.0
  %632 = vmatpush1.xpose.msra.mxu0 0.0
  %633 = vmatprep.subr.mxu0 0.0
  %634 = vmatpush1.xpose.msra.mxu0 0.0
  %635 = vmatprep.subr.mxu0 0.0
  %636 = vmatpush1.xpose.msra.mxu0 0.0
  %637 = vmatprep.subr.mxu0 0.0
  %638 = vmatpush1.xpose.msra.mxu0 0.0
  %639 = vmatprep.subr.mxu0 0.0
  %640 = vmatpush1.xpose.msra.mxu0 0.0
  %641 = vmatprep.subr.mxu0 0.0
  %642 = vmatpush1.xpose.msra.mxu0 0.0
  %643 = vmatprep.subr.mxu0 0.0
  %644 = vmatpush1.xpose.msra.mxu0 0.0
  %645 = vmatprep.subr.mxu0 0.0
  %646 = vmatpush1.xpose.msra.mxu0 0.0
  %647 = vmatprep.subr.mxu0 0.0
  %648 = vmatpush1.xpose.msra.mxu0 0.0
  %649 = vmatprep.subr.mxu0 0.0
  %650 = vmatpush1.xpose.msra.mxu0 0.0
  %651 = vmatprep.subr.mxu0 0.0
  %652 = vmatpush1.xpose.msra.mxu0 0.0
  %653 = vmatprep.subr.mxu0 0.0
  %654 = vmatpush1.xpose.msra.mxu0 0.0
  %655 = vmatprep.subr.mxu0 0.0
  %656 = vmatpush1.xpose.msra.mxu0 0.0
  %657 = vmatprep.subr.mxu0 0.0
  %658 = vmatpush1.xpose.msra.mxu0 0.0
  %659 = vmatprep.subr.mxu0 0.0
  %660 = vmatpush1.xpose.msra.mxu0 0.0
  %661 = vmatprep.subr.mxu0 0.0
  %662 = vmatpush1.xpose.msra.mxu0 0.0
  %663 = vmatprep.subr.mxu0 0.0
  %664 = vmatpush1.xpose.msra.mxu0 0.0
  %665 = vmatprep.mubr.f32.mxu0 0.0
  %666 = vmatmul.mubr.f32.gmra.mrb[0].mxu0 %v503
  %v667 = vpop.f32.mrb[0].mxu0
  %v668 = vadd.f32 %v500, %v667
  %v669 = vpop.f32.mrb[0].mxu0
  %670 = vmatprep.mubr.f32.mxu0 0.0
  %671 = vmatmul.mubr.f32.gmra.mrb[0].mxu0 %v506
  %v672 = vpop.f32.mrb[0].mxu0
  %v673 = vadd.f32 %v500, %v672
  %v674 = vpop.f32.mrb[0].mxu0
  %675 = vmatprep.mubr.f32.mxu0 0.0
  %676 = vmatmul.mubr.f32.gmra.mrb[0].mxu0 %v509
  %v677 = vpop.f32.mrb[0].mxu0
  %v678 = vadd.f32 %v500, %v677
  %v679 = vpop.f32.mrb[0].mxu0
  %680 = vmatprep.mubr.f32.mxu0 0.0
  %681 = vmatmul.mubr.f32.gmra.mrb[0].mxu0 %v512
  %v682 = vpop.f32.mrb[0].mxu0
  %v683 = vadd.f32 %v500, %v682
  %v684 = vpop.f32.mrb[0].mxu0
  %685 = vmatprep.mubr.f32.mxu0 0.0
  %686 = vmatmul.mubr.f32.gmra.mrb[0].mxu0 %v515
  %v687 = vpop.f32.mrb[0].mxu0
  %v688 = vadd.f32 %v500, %v687
  %v689 = vpop.f32.mrb[0].mxu0
  %690 = vmatprep.mubr.f32.mxu0 0.0
  %691 = vmatmul.mubr.f32.gmra.mrb[0].mxu0 %v518
  %v692 = vpop.f32.mrb[0].mxu0
  %v693 = vadd.f32 %v500, %v692
  %v694 = vpop.f32.mrb[0].mxu0
  %695 = vmatprep.mubr.f32.mxu0 0.0
  %696 = vmatmul.mubr.f32.gmra.mrb[0].mxu0 %v521
  %v697 = vpop.f32.mrb[0].mxu0
  %v698 = vadd.f32 %v500, %v697
  %v699 = vpop.f32.mrb[0].mxu0
  %700 = vmatprep.mubr.f32.mxu0 0.0
  %701 = vmatmul.mubr.f32.gmra.mrb[0].mxu0 %v524
  %v702 = vpop.f32.mrb[0].mxu0
  %v703 = vadd.f32 %v500, %v702
  %v704 = vpop.f32.mrb[0].mxu0
  %705 = vmatprep.mubr.f32.mxu0 0.0
  %706 = vmatmul.mubr.f32.gmra.mrb[0].mxu0 %v527
  %v707 = vpop.f32.mrb[0].mxu0
  %v708 = vadd.f32 %v500, %v707
  %v709 = vpop.f32.mrb[0].mxu0
  %710 = vmatprep.mubr.f32.mxu0 0.0
  %711 = vmatmul.mubr.f32.gmra.mrb[0].mxu0 %v530
  %v712 = vpop.f32.mrb[0].mxu0
  %v713 = vadd.f32 %v500, %v712
  %v714 = vpop.f32.mrb[0].mxu0
  %715 = vmatprep.mubr.f32.mxu0 0.0
  %716 = vmatmul.mubr.f32.gmra.mrb[0].mxu0 %v533
  %v717 = vpop.f32.mrb[0].mxu0
  %v718 = vadd.f32 %v500, %v717
  %v719 = vpop.f32.mrb[0].mxu0
  %720 = vmatprep.mubr.f32.mxu0 0.0
  %721 = vmatmul.mubr.f32.gmra.mrb[0].mxu0 %v536
  %v722 = vpop.f32.mrb[0].mxu0
  %v723 = vadd.f32 %v500, %v722
  %v724 = vpop.f32.mrb[0].mxu0
  %725 = vmatprep.mubr.f32.mxu0 0.0
  %726 = vmatmul.mubr.f32.gmra.mrb[0].mxu0 %v539
  %v727 = vpop.f32.mrb[0].mxu0
  %v728 = vadd.f32 %v500, %v727
  %v729 = vpop.f32.mrb[0].mxu0
  %730 = vmatprep.mubr.f32.mxu0 0.0
  %731 = vmatmul.mubr.f32.gmra.mrb[0].mxu0 %v542
  %v732 = vpop.f32.mrb[0].mxu0
  %v733 = vadd.f32 %v500, %v732
  %v734 = vpop.f32.mrb[0].mxu0
  %735 = vmatprep.mubr.f32.mxu0 0.0
  %736 = vmatmul.mubr.f32.gmra.mrb[0].mxu0 %v545
  %v737 = vpop.f32.mrb[0].mxu0
  %v738 = vadd.f32 %v500, %v737
  %v739 = vpop.f32.mrb[0].mxu0
  %740 = vmatprep.mubr.f32.mxu0 0.0
  %741 = vmatmul.mubr.f32.gmra.mrb[0].mxu0 %v548
  %v742 = vpop.f32.mrb[0].mxu0
  %v743 = vadd.f32 %v500, %v742
  %v744 = vpop.f32.mrb[0].mxu0
  %745 = vmatprep.mubr.f32.mxu0 0.0
  %746 = vmatmul.mubr.f32.gmra.mrb[0].mxu0 %v551
  %v747 = vpop.f32.mrb[0].mxu0
  %v748 = vadd.f32 %v500, %v747
  %v749 = vpop.f32.mrb[0].mxu0
  %750 = vmatprep.mubr.f32.mxu0 0.0
  %751 = vmatmul.mubr.f32.gmra.mrb[0].mxu0 %v554
  %v752 = vpop.f32.mrb[0].mxu0
  %v753 = vadd.f32 %v500, %v752
  %v754 = vpop.f32.mrb[0].mxu0
  %755 = vmatprep.mubr.f32.mxu0 0.0
  %756 = vmatmul.mubr.f32.gmra.mrb[0].mxu0 %v557
  %v757 = vpop.f32.mrb[0].mxu0
  %v758 = vadd.f32 %v500, %v757
  %v759 = vpop.f32.mrb[0].mxu0
  %760 = vmatprep.mubr.f32.mxu0 0.0
  %761 = vmatmul.mubr.f32.gmra.mrb[0].mxu0 %v560
  %v762 = vpop.f32.mrb[0].mxu0
  %v763 = vadd.f32 %v500, %v762
  %v764 = vpop.f32.mrb[0].mxu0
  %765 = vmatprep.mubr.f32.mxu0 0.0
  %766 = vmatmul.mubr.f32.gmra.mrb[0].mxu0 %v563
  %v767 = vpop.f32.mrb[0].mxu0
  %v768 = vadd.f32 %v500, %v767
  %v769 = vpop.f32.mrb[0].mxu0
  %770 = vmatprep.mubr.f32.mxu0 0.0
  %771 = vmatmul.mubr.f32.gmra.mrb[0].mxu0 %v566
  %v772 = vpop.f32.mrb[0].mxu0
  %v773 = vadd.f32 %v500, %v772
  %v774 = vpop.f32.mrb[0].mxu0
  %775 = vmatprep.mubr.f32.mxu0 0.0
  %776 = vmatmul.mubr.f32.gmra.mrb[0].mxu0 %v569
  %v777 = vpop.f32.mrb[0].mxu0
  %v778 = vadd.f32 %v500, %v777
  %v779 = vpop.f32.mrb[0].mxu0
  %780 = vmatprep.mubr.f32.mxu0 0.0
  %781 = vmatmul.mubr.f32.gmra.mrb[0].mxu0 %v572
  %v782 = vpop.f32.mrb[0].mxu0
  %v783 = vadd.f32 %v500, %v782
  %v784 = vpop.f32.mrb[0].mxu0
  %785 = vmatprep.mubr.f32.mxu0 0.0
  %786 = vmatmul.mubr.f32.gmra.mrb[0].mxu0 %v575
  %v787 = vpop.f32.mrb[0].mxu0
  %v788 = vadd.f32 %v500, %v787
  %v789 = vpop.f32.mrb[0].mxu0
  %790 = vmatprep.mubr.f32.mxu0 0.0
  %791 = vmatmul.mubr.f32.gmra.mrb[0].mxu0 %v578
  %v792 = vpop.f32.mrb[0].mxu0
  %v793 = vadd.f32 %v500, %v792
  %v794 = vpop.f32.mrb[0].mxu0
  %795 = vmatprep.mubr.f32.mxu0 0.0
  %796 = vmatmul.mubr.f32.gmra.mrb[0].mxu0 %v581
  %v797 = vpop.f32.mrb[0].mxu0
  %v798 = vadd.f32 %v500, %v797
  %v799 = vpop.f32.mrb[0].mxu0
  %800 = vmatprep.mubr.f32.mxu0 0.0
  %801 = vmatmul.mubr.f32.gmra.mrb[0].mxu0 %v584
  %v802 = vpop.f32.mrb[0].mxu0
  %v803 = vadd.f32 %v500, %v802
  %v804 = vpop.f32.mrb[0].mxu0
  %805 = vmatprep.mubr.f32.mxu0 0.0
  %806 = vmatmul.mubr.f32.gmra.mrb[0].mxu0 %v587
  %v807 = vpop.f32.mrb[0].mxu0
  %v808 = vadd.f32 %v500, %v807
  %v809 = vpop.f32.mrb[0].mxu0
  %810 = vmatprep.mubr.f32.mxu0 0.0
  %811 = vmatmul.mubr.f32.gmra.mrb[0].mxu0 %v590
  %v812 = vpop.f32.mrb[0].mxu0
  %v813 = vadd.f32 %v500, %v812
  %v814 = vpop.f32.mrb[0].mxu0
  %815 = vmatprep.mubr.f32.mxu0 0.0
  %816 = vmatmul.mubr.f32.gmra.mrb[0].mxu0 %v593
  %v817 = vpop.f32.mrb[0].mxu0
  %v818 = vadd.f32 %v500, %v817
  %v819 = vpop.f32.mrb[0].mxu0
  %820 = vmatprep.mubr.f32.mxu0 0.0
  %821 = vmatmul.mubr.f32.gmra.mrb[0].mxu0 %v596
  %v822 = vpop.f32.mrb[0].mxu0
  %v823 = vadd.f32 %v500, %v822
  %v824 = vpop.f32.mrb[0].mxu0
  %825 = vdwg.mxu0
  %vm826 = vcmask 31744
  %827 = vst.msk [vmem:[%s7] sm:$0xff] %vm826, %v668
  %828 = vst.msk [vmem:[%s7 + $0x8] sm:$0xff] %vm826, %v673
  %829 = vst.msk [vmem:[%s7 + $0x10] sm:$0xff] %vm826, %v678
  %830 = vst.msk [vmem:[%s7 + $0x18] sm:$0xff] %vm826, %v683
  %831 = vst.msk [vmem:[%s7 + $0x20] sm:$0xff] %vm826, %v688
  %832 = vst.msk [vmem:[%s7 + $0x28] sm:$0xff] %vm826, %v693
  %833 = vst.msk [vmem:[%s7 + $0x30] sm:$0xff] %vm826, %v698
  %834 = vst.msk [vmem:[%s7 + $0x38] sm:$0xff] %vm826, %v703
  %835 = vst.msk [vmem:[%s7 + $0x40] sm:$0xff] %vm826, %v708
  %836 = vst.msk [vmem:[%s7 + $0x48] sm:$0xff] %vm826, %v713
  %837 = vst.msk [vmem:[%s7 + $0x50] sm:$0xff] %vm826, %v718
  %838 = vst.msk [vmem:[%s7 + $0x58] sm:$0xff] %vm826, %v723
  %839 = vst.msk [vmem:[%s7 + $0x60] sm:$0xff] %vm826, %v728
  %840 = vst.msk [vmem:[%s7 + $0x68] sm:$0xff] %vm826, %v733
  %841 = vst.msk [vmem:[%s7 + $0x70] sm:$0xff] %vm826, %v738
  %842 = vst.msk [vmem:[%s7 + $0x78] sm:$0xff] %vm826, %v743
  %843 = vst.msk [vmem:[%s7 + $0x80] sm:$0xff] %vm826, %v748
  %844 = vst.msk [vmem:[%s7 + $0x88] sm:$0xff] %vm826, %v753
  %845 = vst.msk [vmem:[%s7 + $0x90] sm:$0xff] %vm826, %v758
  %846 = vst.msk [vmem:[%s7 + $0x98] sm:$0xff] %vm826, %v763
  %847 = vst.msk [vmem:[%s7 + $0xa0] sm:$0xff] %vm826, %v768
  %848 = vst.msk [vmem:[%s7 + $0xa8] sm:$0xff] %vm826, %v773
  %849 = vst.msk [vmem:[%s7 + $0xb0] sm:$0xff] %vm826, %v778
  %850 = vst.msk [vmem:[%s7 + $0xb8] sm:$0xff] %vm826, %v783
  %851 = vst.msk [vmem:[%s7 + $0xc0] sm:$0xff] %vm826, %v788
  %852 = vst.msk [vmem:[%s7 + $0xc8] sm:$0xff] %vm826, %v793
  %853 = vst.msk [vmem:[%s7 + $0xd0] sm:$0xff] %vm826, %v798
  %854 = vst.msk [vmem:[%s7 + $0xd8] sm:$0xff] %vm826, %v803
  %855 = vst.msk [vmem:[%s7 + $0xe0] sm:$0xff] %vm826, %v808
  %856 = vst.msk [vmem:[%s7 + $0xe8] sm:$0xff] %vm826, %v813
  %857 = vst.msk [vmem:[%s7 + $0xf0] sm:$0xff] %vm826, %v818
  %858 = vst.msk [vmem:[%s7 + $0xf8] sm:$0xff] %vm826, %v823
  // Predicated region
  $region30: #{tpu_custom_call.1} parent=0 // pred_check
    _
  $region31: #{tpu_custom_call.1} parent=0 // pred_check_branch
    %860 = sbr.rel (0) target = $region33
  $region32: #{tpu_custom_call.1} parent=0 // pred_region
    _
  $region33: #{tpu_custom_call.1} parent=0 // pred_fallthru
    _
  // Predicated region
  $region34: #{tpu_custom_call.1} parent=0 // pred_check
    _
  $region35: #{tpu_custom_call.1} parent=0 // pred_check_branch
    %862 = sbr.rel (0) target = $region37
  $region36: #{tpu_custom_call.1} parent=0 // pred_region
    _
  $region37: #{tpu_custom_call.1} parent=0 // pred_fallthru
    _

</llo_original>
